<compile_context>
chip_gen: v6e
topology: v6e:2x2x1
jax: 0.10.0
libtpu: 0.0.40
codegen_flags: <defaults>
</compile_context>

<pallas_src>
import numpy as np
import jax
import jax.numpy as jnp
from jax import lax
from jax.experimental import pallas as pl
from jax.experimental.pallas import tpu as pltpu

D_MODEL = 32      # d_model
NHEAD = 8         # nhead -> head_dim = 4
DIM_FF = 64       # dim_feedforward (small for the synthetic test)
EPS = 1e-5        # layer_norm_eps


def _layernorm(x, g, b):
    mu = jnp.mean(x, axis=-1, keepdims=True)
    var = jnp.mean((x - mu) ** 2, axis=-1, keepdims=True)
    return (x - mu) * lax.rsqrt(var + EPS) * g + b


def _dims(N, L, S):
    E, H, F = D_MODEL, NHEAD, DIM_FF
    NL, NS, SE, SH = N * L, N * S, S * E, S * H
    WN = max(SH, F, E)                      # lane width of the narrow slab
    return E, H, F, NL, NS, SE, SH, WN


# ----------------------------------------------------------------------------
# One-time parameter packing (hoisted out of the forward path).
# ----------------------------------------------------------------------------
def pack_params(params, N, L, S):
    E, H, F, NL, NS, SE, SH, WN = _dims(N, L, S)
    hd = E // H
    f32 = np.float32
    g = lambda k: np.asarray(params[k], f32)

    assert NL % 8 == 0 and NS % 8 == 0 and SH % 8 == 0 and SE % 128 == 0
    assert E % 8 == 0 and F % 8 == 0

    scale = 1.0 / np.sqrt(hd)
    w_in, b_in = g('in_proj_weight'), g('in_proj_bias')
    wq, bq = w_in[0:E].T * scale, b_in[0:E] * scale      # scale folded into Q
    wk, bk = w_in[E:2 * E].T, b_in[E:2 * E]
    wv, bv = w_in[2 * E:3 * E].T, b_in[2 * E:3 * E]

    # weights tiled S times along the lane axis -> (E, S*E)
    wq_rep, bq_rep = np.tile(wq, (1, S)), np.tile(bq, S)
    wk_rep, bk_rep = np.tile(wk, (1, S)), np.tile(bk, S)
    wv_rep, bv_rep = np.tile(wv, (1, S)), np.tile(bv, S)

    s_of_col = np.arange(SE) // E            # lane -> s
    e_of_col = np.arange(SE) % E             # lane -> e
    head_of_col = e_of_col // hd             # lane -> head(e)

    # spread mask: row (s',n') keeps only its own s-block of lanes
    s_of_kvrow = np.arange(NS) // N
    spread = (s_of_col[None, :] == s_of_kvrow[:, None]).astype(f32)   # (NS, SE)

    # batch selector: query row (l,n) gathers kv rows with n'==n
    n_of_qrow = np.arange(NL) % N
    n_of_kvrow = np.arange(NS) % N
    a_sel = (n_of_kvrow[None, :] == n_of_qrow[:, None]).astype(f32)   # (NL, NS)
    a_pad = np.zeros((NL, SE), f32)
    a_pad[:, :NS] = a_sel

    # head expansion selector (S*H, S*E) and its transpose (score selector)
    s_of_prow = np.arange(SH) // H
    h_of_prow = np.arange(SH) % H
    sel_expand = ((s_of_prow[:, None] == s_of_col[None, :]) &
                  (h_of_prow[:, None] == head_of_col[None, :])).astype(f32)
    sel_score = np.ascontiguousarray(sel_expand.T)                    # (SE, SH)

    # sum over s: (S*E, E) stacked identity blocks
    sel_red = np.zeros((SE, E), f32)
    sel_red[np.arange(SE), e_of_col] = 1.0

    def padw(a):                              # pad columns to the narrow width
        out = np.zeros((a.shape[0], WN), f32)
        out[:, :a.shape[1]] = a
        return out

    p64 = np.concatenate([
        padw(sel_score),                      # rows 0        : SE
        padw(sel_red),                        # rows SE       : 2*SE
        padw(g('linear1_weight').T),          # rows 2*SE     : 2*SE+E
        padw(g('out_proj_weight').T),         # rows 2*SE+E   : 2*SE+2E
        padw(g('linear2_weight').T),          # rows 2*SE+2E  : 2*SE+2E+F
    ], axis=0)

    def vrow(v):
        r = np.zeros((1, SE), f32)
        r[0, :v.shape[0]] = v
        return r

    vec_rows = np.concatenate([
        vrow(bq_rep), vrow(bk_rep), vrow(bv_rep),
        vrow(g('out_proj_bias')), vrow(g('linear1_bias')), vrow(g('linear2_bias')),
        vrow(g('norm1_weight')), vrow(g('norm1_bias')),
        vrow(g('norm2_weight')), vrow(g('norm2_bias')),
        vrow(g('norm3_weight')), vrow(g('norm3_bias')),
        np.zeros((4, SE), f32),
    ], axis=0)                                # (16, SE)

    p256 = np.concatenate(
        [wq_rep, wk_rep, wv_rep, spread, sel_expand, a_pad, vec_rows], axis=0)

    return {'p256': jnp.asarray(p256), 'p64': jnp.asarray(p64)}


# ----------------------------------------------------------------------------
# Kernel
# ----------------------------------------------------------------------------
def _make_kernel(N, L, S):
    E, H, F, NL, NS, SE, SH, WN = _dims(N, L, S)

    # static row offsets inside the packed slabs (must match pack_params)
    o_wq, o_wk, o_wv = 0, E, 2 * E
    o_spread = 3 * E
    o_exp = o_spread + NS
    o_a = o_exp + SH
    o_vec = o_a + NL
    o_score, o_red = 0, SE
    o_w1 = 2 * SE
    o_wout = o_w1 + E
    o_w2 = o_wout + E

    def kernel(acts_ref, p256_ref, p64_ref, o_ref):
        f32 = jnp.float32
        x0 = acts_ref[0:NL, :]                 # (NL, E) rows in (l, n) order
        mem = acts_ref[NL:NL + NS, :]          # (NS, E) rows in (s, n) order

        wq_rep = p256_ref[o_wq:o_wq + E, :]
        wk_rep = p256_ref[o_wk:o_wk + E, :]
        wv_rep = p256_ref[o_wv:o_wv + E, :]
        spread = p256_ref[o_spread:o_spread + NS, :]
        sel_exp = p256_ref[o_exp:o_exp + SH, :]
        a_sel = p256_ref[o_a:o_a + NL, 0:NS]
        vecs = p256_ref[o_vec:o_vec + 16, :]

        bq_rep, bk_rep, bv_rep = vecs[0:1, :], vecs[1:2, :], vecs[2:3, :]
        b_out = vecs[3:4, 0:E]
        b1 = vecs[4:5, 0:F]
        b2 = vecs[5:6, 0:E]
        ln1g, ln1b = vecs[6:7, 0:E], vecs[7:8, 0:E]
        ln2g, ln2b = vecs[8:9, 0:E], vecs[9:10, 0:E]
        ln3g, ln3b = vecs[10:11, 0:E], vecs[11:12, 0:E]

        sel_score = p64_ref[o_score:o_score + SE, :]
        sel_red = p64_ref[o_red:o_red + SE, :]
        w1 = p64_ref[o_w1:o_w1 + E, :]
        w_out = p64_ref[o_wout:o_wout + E, :]
        w2 = p64_ref[o_w2:o_w2 + F, :]

        # ---- x = LayerNorm1(tgt + dropout1(tgt)); dropout == identity -------
        x = _layernorm(x0 + x0, ln1g, ln1b)                            # (NL, E)

        # ---- Q, tiled S times on lanes (scale already folded in) ------------
        q_b = jnp.dot(x, wq_rep, preferred_element_type=f32) + bq_rep  # (NL, SE)

        # ---- K/V per-query-row slabs: project, spread to s-block, gather ----
        k_wide = (jnp.dot(mem, wk_rep, preferred_element_type=f32) + bk_rep) * spread
        v_wide = (jnp.dot(mem, wv_rep, preferred_element_type=f32) + bv_rep) * spread
        k_b = jnp.dot(a_sel, k_wide, preferred_element_type=f32)       # (NL, SE)
        v_b = jnp.dot(a_sel, v_wide, preferred_element_type=f32)       # (NL, SE)

        # ---- scores[(l,n), s*H+h] = sum_{e in head h} q*k ; softmax over s --
        scores = jnp.dot(q_b * k_b, sel_score,
                         preferred_element_type=f32)[:, 0:SH]          # (NL, SH)
        m = jnp.max(scores, axis=-1, keepdims=True)   # per-row shift (softmax-invariant)
        p = jnp.exp(scores - m)
        p_e = jnp.dot(p, sel_exp, preferred_element_type=f32)          # (NL, SE)
        num = jnp.dot(p_e * v_b, sel_red, preferred_element_type=f32)[:, 0:E]
        den = jnp.dot(p_e, sel_red, preferred_element_type=f32)[:, 0:E]
        ctx = num / den                                                 # (NL, E)

        attn = jnp.dot(ctx, w_out, preferred_element_type=f32)[:, 0:E] + b_out
        x = _layernorm(x + attn, ln2g, ln2b)

        # ---- feed-forward (relu) + residual + LayerNorm3 ---------------------
        h1 = jnp.maximum(
            jnp.dot(x, w1, preferred_element_type=f32)[:, 0:F] + b1, 0.0)
        ff = jnp.dot(h1, w2, preferred_element_type=f32)[:, 0:E] + b2
        # TODO(synk): a (NL*E/128, 128) lane-dense output store was considered;
        # skipped here because the 2 KiB output makes the masked-store cost
        # negligible vs. launch/DMA overhead and the required in-kernel
        # (16,32)->(4,128) retiling is not guaranteed to lower on all Mosaic
        # versions.
        o_ref[...] = _layernorm(x + ff, ln3g, ln3b)

    return kernel


def _make_pallas_call(N, L, S, rows256, rows64):
    E, H, F, NL, NS, SE, SH, WN = _dims(N, L, S)

    flops = 2 * (NL * E * SE + 2 * NS * E * SE + 2 * NL * NS * SE
                 + NL * SE * WN + NL * SH * SE + 2 * NL * SE * WN
                 + NL * E * WN + NL * E * F + NL * F * WN)
    bytes_accessed = 4 * ((NL + NS) * E + rows256 * SE + rows64 * WN + NL * E)
    cost = pl.CostEstimate(flops=int(flops),
                           transcendentals=int(NL * SH + 3 * NL),
                           bytes_accessed=int(bytes_accessed))

    return pl.pallas_call(
        _make_kernel(N, L, S),
        out_shape=jax.ShapeDtypeStruct((NL, E), jnp.float32),
        grid=(1,),
        in_specs=[
            pl.BlockSpec((NL + NS, E), lambda i: (0, 0)),
            pl.BlockSpec((rows256, SE), lambda i: (0, 0)),
            pl.BlockSpec((rows64, WN), lambda i: (0, 0)),
        ],
        out_specs=pl.BlockSpec((NL, E), lambda i: (0, 0)),
        compiler_params=pltpu.CompilerParams(
            dimension_semantics=("arbitrary",),
            vmem_limit_bytes=4 * 1024 * 1024),
        cost_estimate=cost,
        # TODO(synk): at larger N/L/S, add a "parallel" batch grid axis (dual
        # TensorCores on v7x) and tile over S flash-style instead of the fully
        # materialised (NL, S*E) slabs; also amortise launch overhead by
        # stacking several decoder layers per pallas_call.
    )


def build_decoder_layer(params, N, L, S):
    """One-time setup: packs parameters and builds the pallas_call, then
    returns a jitted forward whose per-call work is just free reshapes, one
    tiny concat and the kernel launch."""
    E = D_MODEL
    packed = pack_params(params, N, L, S)
    call = _make_pallas_call(N, L, S, packed['p256'].shape[0],
                             packed['p64'].shape[0])

    @jax.jit
    def forward(tgt, memory, p256, p64):
        # seq-major flattening: pure (bitcast) reshapes, no transposes.
        acts = jnp.concatenate([tgt.reshape(L * N, E),
                                memory.reshape(S * N, E)], axis=0)
        out = call(acts, p256, p64)
        return out.reshape(L, N, E)

    return forward, packed


# ----------------------------------------------------------------------------
# Synthetic parameters + pure-JAX reference (PyTorch eval-mode semantics)
# ----------------------------------------------------------------------------
def init_params(key):
    E, F = D_MODEL, DIM_FF
    ks = jax.random.split(key, 8)
    p = {}
    p['in_proj_weight'] = 0.05 * jax.random.normal(ks[0], (3 * E, E), jnp.float32)
    p['in_proj_bias'] = 0.01 * jax.random.normal(ks[1], (3 * E,), jnp.float32)
    p['out_proj_weight'] = 0.05 * jax.random.normal(ks[2], (E, E), jnp.float32)
    p['out_proj_bias'] = 0.01 * jax.random.normal(ks[3], (E,), jnp.float32)
    p['linear1_weight'] = 0.05 * jax.random.normal(ks[4], (F, E), jnp.float32)
    p['linear1_bias'] = 0.01 * jax.random.normal(ks[5], (F,), jnp.float32)
    p['linear2_weight'] = 0.05 * jax.random.normal(ks[6], (E, F), jnp.float32)
    p['linear2_bias'] = 0.01 * jax.random.normal(ks[7], (E,), jnp.float32)
    p['norm1_weight'] = jnp.ones((E,), jnp.float32)
    p['norm1_bias'] = jnp.zeros((E,), jnp.float32)
    p['norm2_weight'] = jnp.full((E,), 1.1, jnp.float32)
    p['norm2_bias'] = jnp.full((E,), 0.01, jnp.float32)
    p['norm3_weight'] = jnp.full((E,), 0.9, jnp.float32)
    p['norm3_bias'] = jnp.full((E,), -0.01, jnp.float32)
    return p


def reference(tgt, memory, p):
    E, H = D_MODEL, NHEAD
    hd = E // H
    L, N, _ = tgt.shape
    S = memory.shape[0]
    x = tgt + tgt
    x = _layernorm(x, p['norm1_weight'], p['norm1_bias'])
    q = x @ p['in_proj_weight'][:E].T + p['in_proj_bias'][:E]
    k = memory @ p['in_proj_weight'][E:2 * E].T + p['in_proj_bias'][E:2 * E]
    v = memory @ p['in_proj_weight'][2 * E:].T + p['in_proj_bias'][2 * E:]
    qh = q.reshape(L, N, H, hd).transpose(1, 2, 0, 3) / np.sqrt(hd)
    kh = k.reshape(S, N, H, hd).transpose(1, 2, 0, 3)
    vh = v.reshape(S, N, H, hd).transpose(1, 2, 0, 3)
    s = qh @ jnp.swapaxes(kh, -1, -2)
    a = jax.nn.softmax(s, axis=-1)
    o = (a @ vh).transpose(2, 0, 1, 3).reshape(L, N, E)
    attn = o @ p['out_proj_weight'].T + p['out_proj_bias']
    x = x + attn
    x = _layernorm(x, p['norm2_weight'], p['norm2_bias'])
    ff = jnp.maximum(x @ p['linear1_weight'].T + p['linear1_bias'], 0.0)
    ff = ff @ p['linear2_weight'].T + p['linear2_bias']
    x = x + ff
    x = _layernorm(x, p['norm3_weight'], p['norm3_bias'])
    return x


if __name__ == "__main__":
    key = jax.random.PRNGKey(0)
    kp, kt, km = jax.random.split(key, 3)
    L, S, N = 8, 8, 2
    tgt = jax.random.normal(kt, (L, N, D_MODEL), jnp.float32)
    memory = jax.random.normal(km, (S, N, D_MODEL), jnp.float32)
    params = init_params(kp)

    forward, packed = build_decoder_layer(params, N, L, S)   # one-time setup
    out = forward(tgt, memory, packed['p256'], packed['p64'])
    out = jax.block_until_ready(out)

    ref = reference(tgt, memory, params)
    assert out.shape == (L, N, D_MODEL)
    np.testing.assert_allclose(np.asarray(out), np.asarray(ref),
                               rtol=2e-3, atol=2e-3)
    print("KERNEL_OK")
</pallas_src>

<mosaic_0001>
module attributes {stable_mosaic.version = 11 : i64} {
  func.func @kernel(%arg0: i32, %arg1: memref<32x32xf32, #tpu.memory_space<vmem>>, %arg2: memref<208x256xf32, #tpu.memory_space<vmem>>, %arg3: memref<640x64xf32, #tpu.memory_space<vmem>>, %arg4: memref<16x32xf32, #tpu.memory_space<vmem>>) attributes {dimension_semantics = [#tpu.dimension_semantics<arbitrary>], iteration_bounds = array<i64: 1>, scalar_prefetch = 0 : i64, scratch_operands = 0 : i64, tpu.core_type = #tpu.core_type<tc>, window_params = [{pipeline_mode = #tpu.pipeline_mode<synchronous>, transform_indices = @transform_0, window_bounds = array<i64: 32, 32>}, {pipeline_mode = #tpu.pipeline_mode<synchronous>, transform_indices = @transform_1, window_bounds = array<i64: 208, 256>}, {pipeline_mode = #tpu.pipeline_mode<synchronous>, transform_indices = @transform_2, window_bounds = array<i64: 640, 64>}, {pipeline_mode = #tpu.pipeline_mode<synchronous>, transform_indices = @transform_3, window_bounds = array<i64: 16, 32>}]} {
    %c0 = arith.constant 0 : index
    %c0_0 = arith.constant 0 : index
    %0 = vector.load %arg1[%c0, %c0_0] : memref<32x32xf32, #tpu.memory_space<vmem>>, vector<16x32xf32>
    %c16 = arith.constant 16 : index
    %c0_1 = arith.constant 0 : index
    %1 = vector.load %arg1[%c16, %c0_1] : memref<32x32xf32, #tpu.memory_space<vmem>>, vector<16x32xf32>
    %c0_2 = arith.constant 0 : index
    %c0_3 = arith.constant 0 : index
    %2 = vector.load %arg2[%c0_2, %c0_3] : memref<208x256xf32, #tpu.memory_space<vmem>>, vector<32x256xf32>
    %c32 = arith.constant 32 : index
    %c0_4 = arith.constant 0 : index
    %3 = vector.load %arg2[%c32, %c0_4] : memref<208x256xf32, #tpu.memory_space<vmem>>, vector<32x256xf32>
    %c64 = arith.constant 64 : index
    %c0_5 = arith.constant 0 : index
    %4 = vector.load %arg2[%c64, %c0_5] : memref<208x256xf32, #tpu.memory_space<vmem>>, vector<32x256xf32>
    %c96 = arith.constant 96 : index
    %c0_6 = arith.constant 0 : index
    %5 = vector.load %arg2[%c96, %c0_6] : memref<208x256xf32, #tpu.memory_space<vmem>>, vector<16x256xf32>
    %c112 = arith.constant 112 : index
    %c0_7 = arith.constant 0 : index
    %6 = vector.load %arg2[%c112, %c0_7] : memref<208x256xf32, #tpu.memory_space<vmem>>, vector<64x256xf32>
    %c176 = arith.constant 176 : index
    %c0_8 = arith.constant 0 : index
    %7 = vector.load %arg2[%c176, %c0_8] : memref<208x256xf32, #tpu.memory_space<vmem>>, vector<16x16xf32>
    %c192 = arith.constant 192 : index
    %c0_9 = arith.constant 0 : index
    %8 = vector.load %arg2[%c192, %c0_9] : memref<208x256xf32, #tpu.memory_space<vmem>>, vector<16x256xf32>
    %9 = vector.extract_strided_slice %8 {offsets = [0, 0], sizes = [1, 256], strides = [1, 1]} : vector<16x256xf32> to vector<1x256xf32>
    %10 = vector.extract_strided_slice %8 {offsets = [1, 0], sizes = [1, 256], strides = [1, 1]} : vector<16x256xf32> to vector<1x256xf32>
    %11 = vector.extract_strided_slice %8 {offsets = [2, 0], sizes = [1, 256], strides = [1, 1]} : vector<16x256xf32> to vector<1x256xf32>
    %12 = vector.extract_strided_slice %8 {offsets = [3, 0], sizes = [1, 32], strides = [1, 1]} : vector<16x256xf32> to vector<1x32xf32>
    %13 = vector.extract_strided_slice %8 {offsets = [4, 0], sizes = [1, 64], strides = [1, 1]} : vector<16x256xf32> to vector<1x64xf32>
    %14 = vector.extract_strided_slice %8 {offsets = [5, 0], sizes = [1, 32], strides = [1, 1]} : vector<16x256xf32> to vector<1x32xf32>
    %15 = vector.extract_strided_slice %8 {offsets = [6, 0], sizes = [1, 32], strides = [1, 1]} : vector<16x256xf32> to vector<1x32xf32>
    %16 = vector.extract_strided_slice %8 {offsets = [7, 0], sizes = [1, 32], strides = [1, 1]} : vector<16x256xf32> to vector<1x32xf32>
    %17 = vector.extract_strided_slice %8 {offsets = [8, 0], sizes = [1, 32], strides = [1, 1]} : vector<16x256xf32> to vector<1x32xf32>
    %18 = vector.extract_strided_slice %8 {offsets = [9, 0], sizes = [1, 32], strides = [1, 1]} : vector<16x256xf32> to vector<1x32xf32>
    %19 = vector.extract_strided_slice %8 {offsets = [10, 0], sizes = [1, 32], strides = [1, 1]} : vector<16x256xf32> to vector<1x32xf32>
    %20 = vector.extract_strided_slice %8 {offsets = [11, 0], sizes = [1, 32], strides = [1, 1]} : vector<16x256xf32> to vector<1x32xf32>
    %c0_10 = arith.constant 0 : index
    %c0_11 = arith.constant 0 : index
    %21 = vector.load %arg3[%c0_10, %c0_11] : memref<640x64xf32, #tpu.memory_space<vmem>>, vector<256x64xf32>
    %c256 = arith.constant 256 : index
    %c0_12 = arith.constant 0 : index
    %22 = vector.load %arg3[%c256, %c0_12] : memref<640x64xf32, #tpu.memory_space<vmem>>, vector<256x64xf32>
    %c512 = arith.constant 512 : index
    %c0_13 = arith.constant 0 : index
    %23 = vector.load %arg3[%c512, %c0_13] : memref<640x64xf32, #tpu.memory_space<vmem>>, vector<32x64xf32>
    %c544 = arith.constant 544 : index
    %c0_14 = arith.constant 0 : index
    %24 = vector.load %arg3[%c544, %c0_14] : memref<640x64xf32, #tpu.memory_space<vmem>>, vector<32x64xf32>
    %c576 = arith.constant 576 : index
    %c0_15 = arith.constant 0 : index
    %25 = vector.load %arg3[%c576, %c0_15] : memref<640x64xf32, #tpu.memory_space<vmem>>, vector<64x64xf32>
    %26 = arith.addf %0, %0 : vector<16x32xf32>
    %cst = arith.constant dense<0.000000e+00> : vector<16xf32>
    %27 = vector.multi_reduction <add>, %26, %cst [1] : vector<16x32xf32> to vector<16xf32>
    %28 = vector.shape_cast %27 : vector<16xf32> to vector<16x1xf32>
    %cst_16 = arith.constant 3.200000e+01 : f32
    %29 = vector.broadcast %cst_16 : f32 to vector<16x1xf32>
    %30 = arith.divf %28, %29 : vector<16x1xf32>
    %31 = vector.broadcast %30 : vector<16x1xf32> to vector<16x32xf32>
    %32 = arith.subf %26, %31 : vector<16x32xf32>
    %33 = arith.mulf %32, %32 : vector<16x32xf32>
    %cst_17 = arith.constant dense<0.000000e+00> : vector<16xf32>
    %34 = vector.multi_reduction <add>, %33, %cst_17 [1] : vector<16x32xf32> to vector<16xf32>
    %35 = vector.shape_cast %34 : vector<16xf32> to vector<16x1xf32>
    %cst_18 = arith.constant 3.200000e+01 : f32
    %36 = vector.broadcast %cst_18 : f32 to vector<16x1xf32>
    %37 = arith.divf %35, %36 : vector<16x1xf32>
    %38 = vector.broadcast %30 : vector<16x1xf32> to vector<16x32xf32>
    %39 = arith.subf %26, %38 : vector<16x32xf32>
    %cst_19 = arith.constant 9.99999974E-6 : f32
    %40 = vector.broadcast %cst_19 : f32 to vector<16x1xf32>
    %41 = arith.addf %37, %40 : vector<16x1xf32>
    %42 = math.rsqrt %41 : vector<16x1xf32>
    %43 = vector.broadcast %42 : vector<16x1xf32> to vector<16x32xf32>
    %44 = arith.mulf %39, %43 : vector<16x32xf32>
    %45 = vector.broadcast %15 : vector<1x32xf32> to vector<16x32xf32>
    %46 = arith.mulf %44, %45 : vector<16x32xf32>
    %47 = vector.broadcast %16 : vector<1x32xf32> to vector<16x32xf32>
    %48 = arith.addf %46, %47 : vector<16x32xf32>
    %cst_20 = arith.constant dense<0.000000e+00> : vector<16x256xf32>
    %49 = tpu.matmul %48, %2, %cst_20 {dimension_numbers = #tpu.dot_dimension_numbers<[1], [0], [0], [1], [0, 0, 1, 1], [], []>} : vector<16x32xf32>, vector<32x256xf32>, vector<16x256xf32> -> vector<16x256xf32>
    %50 = vector.broadcast %9 : vector<1x256xf32> to vector<16x256xf32>
    %51 = arith.addf %49, %50 : vector<16x256xf32>
    %cst_21 = arith.constant dense<0.000000e+00> : vector<16x256xf32>
    %52 = tpu.matmul %1, %3, %cst_21 {dimension_numbers = #tpu.dot_dimension_numbers<[1], [0], [0], [1], [0, 0, 1, 1], [], []>} : vector<16x32xf32>, vector<32x256xf32>, vector<16x256xf32> -> vector<16x256xf32>
    %53 = vector.broadcast %10 : vector<1x256xf32> to vector<16x256xf32>
    %54 = arith.addf %52, %53 : vector<16x256xf32>
    %55 = arith.mulf %54, %5 : vector<16x256xf32>
    %cst_22 = arith.constant dense<0.000000e+00> : vector<16x256xf32>
    %56 = tpu.matmul %1, %4, %cst_22 {dimension_numbers = #tpu.dot_dimension_numbers<[1], [0], [0], [1], [0, 0, 1, 1], [], []>} : vector<16x32xf32>, vector<32x256xf32>, vector<16x256xf32> -> vector<16x256xf32>
    %57 = vector.broadcast %11 : vector<1x256xf32> to vector<16x256xf32>
    %58 = arith.addf %56, %57 : vector<16x256xf32>
    %59 = arith.mulf %58, %5 : vector<16x256xf32>
    %cst_23 = arith.constant dense<0.000000e+00> : vector<16x256xf32>
    %60 = tpu.matmul %7, %55, %cst_23 {dimension_numbers = #tpu.dot_dimension_numbers<[1], [0], [0], [1], [0, 0, 1, 1], [], []>} : vector<16x16xf32>, vector<16x256xf32>, vector<16x256xf32> -> vector<16x256xf32>
    %cst_24 = arith.constant dense<0.000000e+00> : vector<16x256xf32>
    %61 = tpu.matmul %7, %59, %cst_24 {dimension_numbers = #tpu.dot_dimension_numbers<[1], [0], [0], [1], [0, 0, 1, 1], [], []>} : vector<16x16xf32>, vector<16x256xf32>, vector<16x256xf32> -> vector<16x256xf32>
    %62 = arith.mulf %51, %60 : vector<16x256xf32>
    %cst_25 = arith.constant dense<0.000000e+00> : vector<16x64xf32>
    %63 = tpu.matmul %62, %21, %cst_25 {dimension_numbers = #tpu.dot_dimension_numbers<[1], [0], [0], [1], [0, 0, 1, 1], [], []>} : vector<16x256xf32>, vector<256x64xf32>, vector<16x64xf32> -> vector<16x64xf32>
    %cst_26 = arith.constant dense<0xFF800000> : vector<16xf32>
    %64 = vector.multi_reduction <maximumf>, %63, %cst_26 [1] : vector<16x64xf32> to vector<16xf32>
    %65 = vector.shape_cast %64 : vector<16xf32> to vector<16x1xf32>
    %66 = vector.broadcast %65 : vector<16x1xf32> to vector<16x64xf32>
    %67 = arith.subf %63, %66 : vector<16x64xf32>
    %68 = math.exp %67 : vector<16x64xf32>
    %cst_27 = arith.constant dense<0.000000e+00> : vector<16x256xf32>
    %69 = tpu.matmul %68, %6, %cst_27 {dimension_numbers = #tpu.dot_dimension_numbers<[1], [0], [0], [1], [0, 0, 1, 1], [], []>} : vector<16x64xf32>, vector<64x256xf32>, vector<16x256xf32> -> vector<16x256xf32>
    %70 = arith.mulf %69, %61 : vector<16x256xf32>
    %cst_28 = arith.constant dense<0.000000e+00> : vector<16x64xf32>
    %71 = tpu.matmul %70, %22, %cst_28 {dimension_numbers = #tpu.dot_dimension_numbers<[1], [0], [0], [1], [0, 0, 1, 1], [], []>} : vector<16x256xf32>, vector<256x64xf32>, vector<16x64xf32> -> vector<16x64xf32>
    %72 = vector.extract_strided_slice %71 {offsets = [0, 0], sizes = [16, 32], strides = [1, 1]} : vector<16x64xf32> to vector<16x32xf32>
    %cst_29 = arith.constant dense<0.000000e+00> : vector<16x64xf32>
    %73 = tpu.matmul %69, %22, %cst_29 {dimension_numbers = #tpu.dot_dimension_numbers<[1], [0], [0], [1], [0, 0, 1, 1], [], []>} : vector<16x256xf32>, vector<256x64xf32>, vector<16x64xf32> -> vector<16x64xf32>
    %74 = vector.extract_strided_slice %73 {offsets = [0, 0], sizes = [16, 32], strides = [1, 1]} : vector<16x64xf32> to vector<16x32xf32>
    %75 = arith.divf %72, %74 : vector<16x32xf32>
    %cst_30 = arith.constant dense<0.000000e+00> : vector<16x64xf32>
    %76 = tpu.matmul %75, %24, %cst_30 {dimension_numbers = #tpu.dot_dimension_numbers<[1], [0], [0], [1], [0, 0, 1, 1], [], []>} : vector<16x32xf32>, vector<32x64xf32>, vector<16x64xf32> -> vector<16x64xf32>
    %77 = vector.extract_strided_slice %76 {offsets = [0, 0], sizes = [16, 32], strides = [1, 1]} : vector<16x64xf32> to vector<16x32xf32>
    %78 = vector.broadcast %12 : vector<1x32xf32> to vector<16x32xf32>
    %79 = arith.addf %77, %78 : vector<16x32xf32>
    %80 = arith.addf %48, %79 : vector<16x32xf32>
    %cst_31 = arith.constant dense<0.000000e+00> : vector<16xf32>
    %81 = vector.multi_reduction <add>, %80, %cst_31 [1] : vector<16x32xf32> to vector<16xf32>
    %82 = vector.shape_cast %81 : vector<16xf32> to vector<16x1xf32>
    %cst_32 = arith.constant 3.200000e+01 : f32
    %83 = vector.broadcast %cst_32 : f32 to vector<16x1xf32>
    %84 = arith.divf %82, %83 : vector<16x1xf32>
    %85 = vector.broadcast %84 : vector<16x1xf32> to vector<16x32xf32>
    %86 = arith.subf %80, %85 : vector<16x32xf32>
    %87 = arith.mulf %86, %86 : vector<16x32xf32>
    %cst_33 = arith.constant dense<0.000000e+00> : vector<16xf32>
    %88 = vector.multi_reduction <add>, %87, %cst_33 [1] : vector<16x32xf32> to vector<16xf32>
    %89 = vector.shape_cast %88 : vector<16xf32> to vector<16x1xf32>
    %cst_34 = arith.constant 3.200000e+01 : f32
    %90 = vector.broadcast %cst_34 : f32 to vector<16x1xf32>
    %91 = arith.divf %89, %90 : vector<16x1xf32>
    %92 = vector.broadcast %84 : vector<16x1xf32> to vector<16x32xf32>
    %93 = arith.subf %80, %92 : vector<16x32xf32>
    %cst_35 = arith.constant 9.99999974E-6 : f32
    %94 = vector.broadcast %cst_35 : f32 to vector<16x1xf32>
    %95 = arith.addf %91, %94 : vector<16x1xf32>
    %96 = math.rsqrt %95 : vector<16x1xf32>
    %97 = vector.broadcast %96 : vector<16x1xf32> to vector<16x32xf32>
    %98 = arith.mulf %93, %97 : vector<16x32xf32>
    %99 = vector.broadcast %17 : vector<1x32xf32> to vector<16x32xf32>
    %100 = arith.mulf %98, %99 : vector<16x32xf32>
    %101 = vector.broadcast %18 : vector<1x32xf32> to vector<16x32xf32>
    %102 = arith.addf %100, %101 : vector<16x32xf32>
    %cst_36 = arith.constant dense<0.000000e+00> : vector<16x64xf32>
    %103 = tpu.matmul %102, %23, %cst_36 {dimension_numbers = #tpu.dot_dimension_numbers<[1], [0], [0], [1], [0, 0, 1, 1], [], []>} : vector<16x32xf32>, vector<32x64xf32>, vector<16x64xf32> -> vector<16x64xf32>
    %104 = vector.broadcast %13 : vector<1x64xf32> to vector<16x64xf32>
    %105 = arith.addf %103, %104 : vector<16x64xf32>
    %cst_37 = arith.constant 0.000000e+00 : f32
    %106 = vector.broadcast %cst_37 : f32 to vector<16x64xf32>
    %107 = arith.maximumf %105, %106 : vector<16x64xf32>
    %cst_38 = arith.constant dense<0.000000e+00> : vector<16x64xf32>
    %108 = tpu.matmul %107, %25, %cst_38 {dimension_numbers = #tpu.dot_dimension_numbers<[1], [0], [0], [1], [0, 0, 1, 1], [], []>} : vector<16x64xf32>, vector<64x64xf32>, vector<16x64xf32> -> vector<16x64xf32>
    %109 = vector.extract_strided_slice %108 {offsets = [0, 0], sizes = [16, 32], strides = [1, 1]} : vector<16x64xf32> to vector<16x32xf32>
    %110 = vector.broadcast %14 : vector<1x32xf32> to vector<16x32xf32>
    %111 = arith.addf %109, %110 : vector<16x32xf32>
    %112 = arith.addf %102, %111 : vector<16x32xf32>
    %cst_39 = arith.constant dense<0.000000e+00> : vector<16xf32>
    %113 = vector.multi_reduction <add>, %112, %cst_39 [1] : vector<16x32xf32> to vector<16xf32>
    %114 = vector.shape_cast %113 : vector<16xf32> to vector<16x1xf32>
    %cst_40 = arith.constant 3.200000e+01 : f32
    %115 = vector.broadcast %cst_40 : f32 to vector<16x1xf32>
    %116 = arith.divf %114, %115 : vector<16x1xf32>
    %117 = vector.broadcast %116 : vector<16x1xf32> to vector<16x32xf32>
    %118 = arith.subf %112, %117 : vector<16x32xf32>
    %119 = arith.mulf %118, %118 : vector<16x32xf32>
    %cst_41 = arith.constant dense<0.000000e+00> : vector<16xf32>
    %120 = vector.multi_reduction <add>, %119, %cst_41 [1] : vector<16x32xf32> to vector<16xf32>
    %121 = vector.shape_cast %120 : vector<16xf32> to vector<16x1xf32>
    %cst_42 = arith.constant 3.200000e+01 : f32
    %122 = vector.broadcast %cst_42 : f32 to vector<16x1xf32>
    %123 = arith.divf %121, %122 : vector<16x1xf32>
    %124 = vector.broadcast %116 : vector<16x1xf32> to vector<16x32xf32>
    %125 = arith.subf %112, %124 : vector<16x32xf32>
    %cst_43 = arith.constant 9.99999974E-6 : f32
    %126 = vector.broadcast %cst_43 : f32 to vector<16x1xf32>
    %127 = arith.addf %123, %126 : vector<16x1xf32>
    %128 = math.rsqrt %127 : vector<16x1xf32>
    %129 = vector.broadcast %128 : vector<16x1xf32> to vector<16x32xf32>
    %130 = arith.mulf %125, %129 : vector<16x32xf32>
    %131 = vector.broadcast %19 : vector<1x32xf32> to vector<16x32xf32>
    %132 = arith.mulf %130, %131 : vector<16x32xf32>
    %133 = vector.broadcast %20 : vector<1x32xf32> to vector<16x32xf32>
    %134 = arith.addf %132, %133 : vector<16x32xf32>
    %c0_44 = arith.constant 0 : index
    %c0_45 = arith.constant 0 : index
    %135 = vector.load %arg4[%c0_44, %c0_45] : memref<16x32xf32, #tpu.memory_space<vmem>>, vector<16x32xf32>
    tpu.vector_store %arg4[%c0_44, %c0_45], %134 {strides = array<i32>} : memref<16x32xf32, #tpu.memory_space<vmem>>, vector<16x32xf32>,
    return
  }
  func.func @transform_0(%arg0: i32) -> (i32, i32) {
    %c0_i32 = arith.constant 0 : i32
    %c0_i32_0 = arith.constant 0 : i32
    %c0_i32_1 = arith.constant 0 : i32
    return %c0_i32, %c0_i32_0 : i32, i32
  }
  func.func @transform_1(%arg0: i32) -> (i32, i32) {
    %c0_i32 = arith.constant 0 : i32
    %c0_i32_0 = arith.constant 0 : i32
    %c0_i32_1 = arith.constant 0 : i32
    return %c0_i32, %c0_i32_0 : i32, i32
  }
  func.func @transform_2(%arg0: i32) -> (i32, i32) {
    %c0_i32 = arith.constant 0 : i32
    %c0_i32_0 = arith.constant 0 : i32
    %c0_i32_1 = arith.constant 0 : i32
    return %c0_i32, %c0_i32_0 : i32, i32
  }
  func.func @transform_3(%arg0: i32) -> (i32, i32) {
    %c0_i32 = arith.constant 0 : i32
    %c0_i32_0 = arith.constant 0 : i32
    %c0_i32_1 = arith.constant 0 : i32
    return %c0_i32, %c0_i32_0 : i32, i32
  }
}

</mosaic_0001>

<llo_original>
// kernel: forward.1
$region0: #{forward.1}
  #allocation0 [shape = 'u32[]', space=smem, size = 0x4, offset = 0x4, fixed_abs, tag = 'smem constant byte address 0x4 - core index']
  #allocation1 [shape = 'u32[144,128]{1,0:T(1,128)}', space=vmem, size = 0x12000, scoped, tag = 'internal scratch']
  %s0 = inlined_call_operand.vmem [shape: f32[32,32], index: 0, kind: input, shape index: {}]
  %s1 = inlined_call_operand.vmem [shape: f32[208,256], index: 1, kind: input, shape index: {}]
  %s2 = inlined_call_operand.vmem [shape: f32[640,64], index: 2, kind: input, shape index: {}]
  %s3 = inlined_call_operand.hbm [shape: f32[16,32], index: 3, kind: output, shape index: {}]
  %s4 = sld [smem:[#allocation0]]
  $region22: #{forward.1} parent=0
    _
  %s6 = ssub.s32 1, %s4
  %s7 = scalar_select 0, %s6, %s4
  $region1: #{forward.1} parent=0
    #allocation2 [shape = 'u8[8192]{0}', space=vmem, size = 0x2000, scoped, tag = 'output window, operand 0, single buffered']
    #allocation3 [shape = 's32[1]{0}', space=sflag, size = 0x4, scoped, tag = 'scoped memory for forward.1']
    %8 = vsyncpa [#allocation3], 0
    // Predicated region
    $region2: #{forward.1} parent=1 // pred_check
      _
    $region3: #{forward.1} parent=1 // pred_check_branch
      %10 = sbr.rel (0) target = $region5
    $region4: #{forward.1} parent=1 // pred_region
      _
    $region5: #{forward.1} parent=1 // pred_fallthru
      _
    // Predicated region
    $region6: #{forward.1} parent=1 // pred_check
      _
    $region7: #{forward.1} parent=1 // pred_check_branch
      %12 = sbr.rel (0) target = $region9
    $region8: #{forward.1} parent=1 // pred_region
      _
    $region9: #{forward.1} parent=1 // pred_fallthru
      _
    // Predicated region
    $region10: #{forward.1} parent=1 // pred_check
      _
    $region11: #{forward.1} parent=1 // pred_check_branch
      %14 = sbr.rel (0) target = $region13
    $region12: #{forward.1} parent=1 // pred_region
      _
    $region13: #{forward.1} parent=1 // pred_fallthru
      _
    %v15 = vld [vmem:[%s0] sm:$0xff]
    %v16 = vld [vmem:[%s0 + $0x8] sm:$0xff]
    %v17 = vld [vmem:[%s0 + $0x10] sm:$0xff]
    %v18 = vld [vmem:[%s0 + $0x18] sm:$0xff]
    %v19 = vld [vmem:[%s1] sm:$0xff]
    %v20 = vld [vmem:[%s1 + $0x8] sm:$0xff]
    %v21 = vld [vmem:[%s1 + $0x10] sm:$0xff]
    %v22 = vld [vmem:[%s1 + $0x18] sm:$0xff]
    %v23 = vld [vmem:[%s1 + $0x20] sm:$0xff]
    %v24 = vld [vmem:[%s1 + $0x28] sm:$0xff]
    %v25 = vld [vmem:[%s1 + $0x30] sm:$0xff]
    %v26 = vld [vmem:[%s1 + $0x38] sm:$0xff]
    %v27 = vld [vmem:[%s1 + $0x40] sm:$0xff]
    %v28 = vld [vmem:[%s1 + $0x48] sm:$0xff]
    %v29 = vld [vmem:[%s1 + $0x50] sm:$0xff]
    %v30 = vld [vmem:[%s1 + $0x58] sm:$0xff]
    %v31 = vld [vmem:[%s1 + $0x60] sm:$0xff]
    %v32 = vld [vmem:[%s1 + $0x68] sm:$0xff]
    %v33 = vld [vmem:[%s1 + $0x70] sm:$0xff]
    %v34 = vld [vmem:[%s1 + $0x78] sm:$0xff]
    %v35 = vld [vmem:[%s1 + $0x80] sm:$0xff]
    %v36 = vld [vmem:[%s1 + $0x88] sm:$0xff]
    %v37 = vld [vmem:[%s1 + $0x90] sm:$0xff]
    %v38 = vld [vmem:[%s1 + $0x98] sm:$0xff]
    %v39 = vld [vmem:[%s1 + $0xa0] sm:$0xff]
    %v40 = vld [vmem:[%s1 + $0xa8] sm:$0xff]
    %v41 = vld [vmem:[%s1 + $0xb0] sm:$0xff]
    %v42 = vld [vmem:[%s1 + $0xb8] sm:$0xff]
    %v43 = vld [vmem:[%s1 + $0xc0] sm:$0xff]
    %v44 = vld [vmem:[%s1 + $0xc8] sm:$0xff]
    %v45 = vld [vmem:[%s1 + $0xd0] sm:$0xff]
    %v46 = vld [vmem:[%s1 + $0xd8] sm:$0xff]
    %v47 = vld [vmem:[%s1 + $0xe0] sm:$0xff]
    %v48 = vld [vmem:[%s1 + $0xe8] sm:$0xff]
    %v49 = vld [vmem:[%s1 + $0xf0] sm:$0xff]
    %v50 = vld [vmem:[%s1 + $0xf8] sm:$0xff]
    %v51 = vld [vmem:[%s1 + $0x100] sm:$0xff]
    %v52 = vld [vmem:[%s1 + $0x108] sm:$0xff]
    %v53 = vld [vmem:[%s1 + $0x110] sm:$0xff]
    %v54 = vld [vmem:[%s1 + $0x118] sm:$0xff]
    %v55 = vld [vmem:[%s1 + $0x120] sm:$0xff]
    %v56 = vld [vmem:[%s1 + $0x128] sm:$0xff]
    %v57 = vld [vmem:[%s1 + $0x130] sm:$0xff]
    %v58 = vld [vmem:[%s1 + $0x138] sm:$0xff]
    %v59 = vld [vmem:[%s1 + $0x140] sm:$0xff]
    %v60 = vld [vmem:[%s1 + $0x148] sm:$0xff]
    %v61 = vld [vmem:[%s1 + $0x150] sm:$0xff]
    %v62 = vld [vmem:[%s1 + $0x158] sm:$0xff]
    %v63 = vld [vmem:[%s1 + $0x160] sm:$0xff]
    %v64 = vld [vmem:[%s1 + $0x170] sm:$0xff]
    %v65 = vld [vmem:[%s1 + $0x180] sm:$0xff]
    %v66 = vld [vmem:[%s1 + $0x188] sm:$0xff]
    %v67 = vld [vmem:[%s1 + $0x190] sm:$0xff]
    %v68 = vld [vmem:[%s2] sm:$0xff]
    %v69 = vld [vmem:[%s2 + $0x8] sm:$0xff]
    %v70 = vld [vmem:[%s2 + $0x10] sm:$0xff]
    %v71 = vld [vmem:[%s2 + $0x18] sm:$0xff]
    %v72 = vld [vmem:[%s2 + $0x20] sm:$0xff]
    %v73 = vld [vmem:[%s2 + $0x28] sm:$0xff]
    %v74 = vld [vmem:[%s2 + $0x30] sm:$0xff]
    %v75 = vld [vmem:[%s2 + $0x38] sm:$0xff]
    %v76 = vld [vmem:[%s2 + $0x40] sm:$0xff]
    %v77 = vld [vmem:[%s2 + $0x48] sm:$0xff]
    %v78 = vld [vmem:[%s2 + $0x50] sm:$0xff]
    %v79 = vld [vmem:[%s2 + $0x58] sm:$0xff]
    %v80 = vld [vmem:[%s2 + $0x60] sm:$0xff]
    %v81 = vld [vmem:[%s2 + $0x68] sm:$0xff]
    %v82 = vld [vmem:[%s2 + $0x70] sm:$0xff]
    %v83 = vld [vmem:[%s2 + $0x78] sm:$0xff]
    %v84 = vld [vmem:[%s2 + $0x80] sm:$0xff]
    %v85 = vld [vmem:[%s2 + $0x88] sm:$0xff]
    %v86 = vld [vmem:[%s2 + $0x90] sm:$0xff]
    %v87 = vld [vmem:[%s2 + $0x98] sm:$0xff]
    %v88 = vld [vmem:[%s2 + $0xa0] sm:$0xff]
    %v89 = vld [vmem:[%s2 + $0xa8] sm:$0xff]
    %v90 = vld [vmem:[%s2 + $0xb0] sm:$0xff]
    %v91 = vld [vmem:[%s2 + $0xb8] sm:$0xff]
    %v92 = vld [vmem:[%s2 + $0xc0] sm:$0xff]
    %v93 = vld [vmem:[%s2 + $0xc8] sm:$0xff]
    %v94 = vld [vmem:[%s2 + $0xd0] sm:$0xff]
    %v95 = vld [vmem:[%s2 + $0xd8] sm:$0xff]
    %v96 = vld [vmem:[%s2 + $0xe0] sm:$0xff]
    %v97 = vld [vmem:[%s2 + $0xe8] sm:$0xff]
    %v98 = vld [vmem:[%s2 + $0xf0] sm:$0xff]
    %v99 = vld [vmem:[%s2 + $0xf8] sm:$0xff]
    %v100 = vld [vmem:[%s2 + $0x100] sm:$0xff]
    %v101 = vld [vmem:[%s2 + $0x108] sm:$0xff]
    %v102 = vld [vmem:[%s2 + $0x110] sm:$0xff]
    %v103 = vld [vmem:[%s2 + $0x118] sm:$0xff]
    %v104 = vld [vmem:[%s2 + $0x120] sm:$0xff]
    %v105 = vld [vmem:[%s2 + $0x128] sm:$0xff]
    %v106 = vld [vmem:[%s2 + $0x130] sm:$0xff]
    %v107 = vld [vmem:[%s2 + $0x138] sm:$0xff]
    %v108 = vld [vmem:[%s2 + $0x140] sm:$0xff]
    %v109 = vld [vmem:[%s2 + $0x148] sm:$0xff]
    %v110 = vld [vmem:[%s2 + $0x150] sm:$0xff]
    %v111 = vld [vmem:[%s2 + $0x158] sm:$0xff]
    %v112 = vld [vmem:[%s2 + $0x160] sm:$0xff]
    %v113 = vld [vmem:[%s2 + $0x168] sm:$0xff]
    %v114 = vld [vmem:[%s2 + $0x170] sm:$0xff]
    %v115 = vld [vmem:[%s2 + $0x178] sm:$0xff]
    %v116 = vld [vmem:[%s2 + $0x180] sm:$0xff]
    %v117 = vld [vmem:[%s2 + $0x188] sm:$0xff]
    %v118 = vld [vmem:[%s2 + $0x190] sm:$0xff]
    %v119 = vld [vmem:[%s2 + $0x198] sm:$0xff]
    %v120 = vld [vmem:[%s2 + $0x1a0] sm:$0xff]
    %v121 = vld [vmem:[%s2 + $0x1a8] sm:$0xff]
    %v122 = vld [vmem:[%s2 + $0x1b0] sm:$0xff]
    %v123 = vld [vmem:[%s2 + $0x1b8] sm:$0xff]
    %v124 = vld [vmem:[%s2 + $0x1c0] sm:$0xff]
    %v125 = vld [vmem:[%s2 + $0x1c8] sm:$0xff]
    %v126 = vld [vmem:[%s2 + $0x1d0] sm:$0xff]
    %v127 = vld [vmem:[%s2 + $0x1d8] sm:$0xff]
    %v128 = vld [vmem:[%s2 + $0x1e0] sm:$0xff]
    %v129 = vld [vmem:[%s2 + $0x1e8] sm:$0xff]
    %v130 = vld [vmem:[%s2 + $0x1f0] sm:$0xff]
    %v131 = vld [vmem:[%s2 + $0x1f8] sm:$0xff]
    %v132 = vld [vmem:[%s2 + $0x200] sm:$0xff]
    %v133 = vld [vmem:[%s2 + $0x208] sm:$0xff]
    %v134 = vld [vmem:[%s2 + $0x210] sm:$0xff]
    %v135 = vld [vmem:[%s2 + $0x218] sm:$0xff]
    %v136 = vld [vmem:[%s2 + $0x220] sm:$0xff]
    %v137 = vld [vmem:[%s2 + $0x228] sm:$0xff]
    %v138 = vld [vmem:[%s2 + $0x230] sm:$0xff]
    %v139 = vld [vmem:[%s2 + $0x238] sm:$0xff]
    %v140 = vld [vmem:[%s2 + $0x240] sm:$0xff]
    %v141 = vld [vmem:[%s2 + $0x248] sm:$0xff]
    %v142 = vld [vmem:[%s2 + $0x250] sm:$0xff]
    %v143 = vld [vmem:[%s2 + $0x258] sm:$0xff]
    %v144 = vld [vmem:[%s2 + $0x260] sm:$0xff]
    %v145 = vld [vmem:[%s2 + $0x268] sm:$0xff]
    %v146 = vld [vmem:[%s2 + $0x270] sm:$0xff]
    %v147 = vld [vmem:[%s2 + $0x278] sm:$0xff]
    %v148 = vadd.f32 %v15, %v15
    %v149 = vadd.f32 %v16, %v16
    %vm150 = vcmask 261120
    %v151 = vsel %vm150, %v148, 0.0
    %152 = vadd.xlane.f32.xlu0 %v151
    %v153 = vpop.xlane.xlu0 %152
    %v154 = vsel %vm150, %v149, 0.0
    %155 = vadd.xlane.f32.xlu0 %v154
    %v156 = vpop.xlane.xlu0 %155
    %v157 = vrcp.pop 32.0
    %v158 = vmul.f32 %v153, %v157
    %v159 = vmul.f32 %v156, %v157
    %v160 = vsub.f32 %v148, %v158
    %v161 = vsub.f32 %v149, %v159
    %v162 = vmul.f32 %v160, %v160
    %v163 = vmul.f32 %v161, %v161
    %v164 = vsel %vm150, %v162, 0.0
    %165 = vadd.xlane.f32.xlu0 %v164
    %v166 = vpop.xlane.xlu0 %165
    %v167 = vsel %vm150, %v163, 0.0
    %168 = vadd.xlane.f32.xlu0 %v167
    %v169 = vpop.xlane.xlu0 %168
    %v170 = vmul.f32 %v166, %v157
    %v171 = vmul.f32 %v169, %v157
    %v172 = vadd.f32 %v170, 1e-05
    %v173 = vadd.f32 %v171, 1e-05
    %v174 = vrsqrt.pop %v172
    %v175 = vrsqrt.pop %v173
    %v176 = vmul.f32 %v160, %v174
    %v177 = vmul.f32 %v161, %v175
    %v178 = vlaneseq
    %v179 = vshrl.u32 %v178, 7
    %v180 = vsub.s32 6, %v179
    %v181 = vrot.slane %v65, %v180
    %v182 = vmul.f32 %v176, %v181
    %v183 = vmul.f32 %v177, %v181
    %v184 = vlaneseq
    %v185 = vshrl.u32 %v184, 7
    %v186 = vsub.s32 7, %v185
    %v187 = vrot.slane %v65, %v186
    %v188 = vadd.f32 %v182, %v187
    %v189 = vadd.f32 %v183, %v187
    %v190 = vlaneseq
    %v191 = vshrl.u32 %v190, 7
    %v192 = vsub.s32 0, %v191
    %v193 = vrot.slane %v65, %v192
    %v194 = vlaneseq
    %v195 = vshrl.u32 %v194, 7
    %v196 = vsub.s32 0, %v195
    %v197 = vrot.slane %v66, %v196
    %v199 = vsel %vm150, %v188, 0
    %v202 = vsel %vm150, %v189, 0
    %204 = vmatprep.subr.mxu0 0.0
    %205 = vmatpush1.msra.mxu0 0.0
    %206 = vmatprep.subr.mxu0 0.0
    %207 = vmatpush1.msra.mxu0 0.0
    %208 = vmatprep.subr.mxu0 0.0
    %209 = vmatpush1.msra.mxu0 0.0
    %210 = vmatprep.subr.mxu0 0.0
    %211 = vmatpush1.msra.mxu0 0.0
    %212 = vmatprep.subr.mxu0 0.0
    %213 = vmatpush1.msra.mxu0 0.0
    %214 = vmatprep.subr.mxu0 0.0
    %215 = vmatpush1.msra.mxu0 0.0
    %216 = vmatprep.subr.mxu0 0.0
    %217 = vmatpush1.msra.mxu0 0.0
    %218 = vmatprep.subr.mxu0 0.0
    %219 = vmatpush1.msra.mxu0 0.0
    %220 = vmatprep.subr.mxu0 0.0
    %221 = vmatpush1.msra.mxu0 0.0
    %222 = vmatprep.subr.mxu0 0.0
    %223 = vmatpush1.msra.mxu0 0.0
    %224 = vmatprep.subr.mxu0 0.0
    %225 = vmatpush1.msra.mxu0 0.0
    %226 = vmatprep.subr.mxu0 0.0
    %227 = vmatpush1.msra.mxu0 0.0
    %228 = vmatprep.subr.mxu0 %v26
    %229 = vmatpush1.msra.mxu0 %v25
    %230 = vmatprep.subr.mxu0 %v24
    %231 = vmatpush1.msra.mxu0 %v23
    %232 = vmatprep.subr.mxu0 %v22
    %233 = vmatpush1.msra.mxu0 %v21
    %234 = vmatprep.subr.mxu0 %v20
    %235 = vmatpush1.msra.mxu0 %v19
    %236 = vmatprep.subr.mxu0 0.0
    %237 = vmatpush2.msra.mxu0 0.0
    %238 = vmatprep.subr.mxu0 0.0
    %239 = vmatpush2.msra.mxu0 0.0
    %240 = vmatprep.subr.mxu0 0.0
    %241 = vmatpush2.msra.mxu0 0.0
    %242 = vmatprep.subr.mxu0 0.0
    %243 = vmatpush2.msra.mxu0 0.0
    %244 = vmatprep.subr.mxu0 0.0
    %245 = vmatpush2.msra.mxu0 0.0
    %246 = vmatprep.subr.mxu0 0.0
    %247 = vmatpush2.msra.mxu0 0.0
    %248 = vmatprep.subr.mxu0 0.0
    %249 = vmatpush2.msra.mxu0 0.0
    %250 = vmatprep.subr.mxu0 0.0
    %251 = vmatpush2.msra.mxu0 0.0
    %252 = vmatprep.subr.mxu0 0.0
    %253 = vmatpush2.msra.mxu0 0.0
    %254 = vmatprep.subr.mxu0 0.0
    %255 = vmatpush2.msra.mxu0 0.0
    %256 = vmatprep.subr.mxu0 0.0
    %257 = vmatpush2.msra.mxu0 0.0
    %258 = vmatprep.subr.mxu0 0.0
    %259 = vmatpush2.msra.mxu0 0.0
    %260 = vmatprep.subr.mxu0 0.0
    %261 = vmatpush2.msra.mxu0 0.0
    %262 = vmatprep.subr.mxu0 0.0
    %263 = vmatpush2.msra.mxu0 0.0
    %264 = vmatprep.subr.mxu0 0.0
    %265 = vmatpush2.msra.mxu0 0.0
    %266 = vmatprep.subr.mxu0 0.0
    %267 = vmatpush2.msra.mxu0 0.0
    %268 = vmatprep.mubr.f32.mxu0 0.0
    %269 = vmatmul.mubr.f32.gmra.mxu0 %v199
    %v270 = vpop.f32.mrf.mxu0
    %v271 = vadd.f32 %v193, %v270
    %v272 = vpop.f32.mrf.mxu0
    %v273 = vadd.f32 %v197, %v272
    %274 = vmatprep.mubr.f32.mxu0 0.0
    %275 = vmatmul.mubr.f32.gmra.mxu0 %v202
    %v276 = vpop.f32.mrf.mxu0
    %v277 = vadd.f32 %v193, %v276
    %v278 = vpop.f32.mrf.mxu0
    %v279 = vadd.f32 %v197, %v278
    %280 = vdwg.mxu0
    %v281 = vlaneseq
    %v282 = vshrl.u32 %v281, 7
    %v283 = vsub.s32 1, %v282
    %v284 = vrot.slane %v65, %v283
    %v285 = vlaneseq
    %v286 = vshrl.u32 %v285, 7
    %v287 = vsub.s32 1, %v286
    %v288 = vrot.slane %v66, %v287
    %v290 = vsel %vm150, %v17, 0
    %v293 = vsel %vm150, %v18, 0
    %295 = vmatprep.subr.mxu0 0.0
    %296 = vmatpush1.msra.mxu0 0.0
    %297 = vmatprep.subr.mxu0 0.0
    %298 = vmatpush1.msra.mxu0 0.0
    %299 = vmatprep.subr.mxu0 0.0
    %300 = vmatpush1.msra.mxu0 0.0
    %301 = vmatprep.subr.mxu0 0.0
    %302 = vmatpush1.msra.mxu0 0.0
    %303 = vmatprep.subr.mxu0 0.0
    %304 = vmatpush1.msra.mxu0 0.0
    %305 = vmatprep.subr.mxu0 0.0
    %306 = vmatpush1.msra.mxu0 0.0
    %307 = vmatprep.subr.mxu0 0.0
    %308 = vmatpush1.msra.mxu0 0.0
    %309 = vmatprep.subr.mxu0 0.0
    %310 = vmatpush1.msra.mxu0 0.0
    %311 = vmatprep.subr.mxu0 0.0
    %312 = vmatpush1.msra.mxu0 0.0
    %313 = vmatprep.subr.mxu0 0.0
    %314 = vmatpush1.msra.mxu0 0.0
    %315 = vmatprep.subr.mxu0 0.0
    %316 = vmatpush1.msra.mxu0 0.0
    %317 = vmatprep.subr.mxu0 0.0
    %318 = vmatpush1.msra.mxu0 0.0
    %319 = vmatprep.subr.mxu0 %v34
    %320 = vmatpush1.msra.mxu0 %v33
    %321 = vmatprep.subr.mxu0 %v32
    %322 = vmatpush1.msra.mxu0 %v31
    %323 = vmatprep.subr.mxu0 %v30
    %324 = vmatpush1.msra.mxu0 %v29
    %325 = vmatprep.subr.mxu0 %v28
    %326 = vmatpush1.msra.mxu0 %v27
    %327 = vmatprep.subr.mxu0 0.0
    %328 = vmatpush2.msra.mxu0 0.0
    %329 = vmatprep.subr.mxu0 0.0
    %330 = vmatpush2.msra.mxu0 0.0
    %331 = vmatprep.subr.mxu0 0.0
    %332 = vmatpush2.msra.mxu0 0.0
    %333 = vmatprep.subr.mxu0 0.0
    %334 = vmatpush2.msra.mxu0 0.0
    %335 = vmatprep.subr.mxu0 0.0
    %336 = vmatpush2.msra.mxu0 0.0
    %337 = vmatprep.subr.mxu0 0.0
    %338 = vmatpush2.msra.mxu0 0.0
    %339 = vmatprep.subr.mxu0 0.0
    %340 = vmatpush2.msra.mxu0 0.0
    %341 = vmatprep.subr.mxu0 0.0
    %342 = vmatpush2.msra.mxu0 0.0
    %343 = vmatprep.subr.mxu0 0.0
    %344 = vmatpush2.msra.mxu0 0.0
    %345 = vmatprep.subr.mxu0 0.0
    %346 = vmatpush2.msra.mxu0 0.0
    %347 = vmatprep.subr.mxu0 0.0
    %348 = vmatpush2.msra.mxu0 0.0
    %349 = vmatprep.subr.mxu0 0.0
    %350 = vmatpush2.msra.mxu0 0.0
    %351 = vmatprep.subr.mxu0 0.0
    %352 = vmatpush2.msra.mxu0 0.0
    %353 = vmatprep.subr.mxu0 0.0
    %354 = vmatpush2.msra.mxu0 0.0
    %355 = vmatprep.subr.mxu0 0.0
    %356 = vmatpush2.msra.mxu0 0.0
    %357 = vmatprep.subr.mxu0 0.0
    %358 = vmatpush2.msra.mxu0 0.0
    %359 = vmatprep.mubr.f32.mxu0 0.0
    %360 = vmatmul.mubr.f32.gmra.mxu0 %v290
    %v361 = vpop.f32.mrf.mxu0
    %v362 = vadd.f32 %v284, %v361
    %v363 = vpop.f32.mrf.mxu0
    %v364 = vadd.f32 %v288, %v363
    %365 = vmatprep.mubr.f32.mxu0 0.0
    %366 = vmatmul.mubr.f32.gmra.mxu0 %v293
    %v367 = vpop.f32.mrf.mxu0
    %v368 = vadd.f32 %v284, %v367
    %v369 = vpop.f32.mrf.mxu0
    %v370 = vadd.f32 %v288, %v369
    %371 = vdwg.mxu0
    %v372 = vmul.f32 %v362, %v43
    %v373 = vmul.f32 %v364, %v44
    %v374 = vmul.f32 %v368, %v45
    %v375 = vmul.f32 %v370, %v46
    %v376 = vlaneseq
    %v377 = vshrl.u32 %v376, 7
    %v378 = vsub.s32 2, %v377
    %v379 = vrot.slane %v65, %v378
    %v380 = vlaneseq
    %v381 = vshrl.u32 %v380, 7
    %v382 = vsub.s32 2, %v381
    %v383 = vrot.slane %v66, %v382
    %384 = vmatprep.subr.mxu0 0.0
    %385 = vmatpush1.msra.mxu0 0.0
    %386 = vmatprep.subr.mxu0 0.0
    %387 = vmatpush1.msra.mxu0 0.0
    %388 = vmatprep.subr.mxu0 0.0
    %389 = vmatpush1.msra.mxu0 0.0
    %390 = vmatprep.subr.mxu0 0.0
    %391 = vmatpush1.msra.mxu0 0.0
    %392 = vmatprep.subr.mxu0 0.0
    %393 = vmatpush1.msra.mxu0 0.0
    %394 = vmatprep.subr.mxu0 0.0
    %395 = vmatpush1.msra.mxu0 0.0
    %396 = vmatprep.subr.mxu0 0.0
    %397 = vmatpush1.msra.mxu0 0.0
    %398 = vmatprep.subr.mxu0 0.0
    %399 = vmatpush1.msra.mxu0 0.0
    %400 = vmatprep.subr.mxu0 0.0
    %401 = vmatpush1.msra.mxu0 0.0
    %402 = vmatprep.subr.mxu0 0.0
    %403 = vmatpush1.msra.mxu0 0.0
    %404 = vmatprep.subr.mxu0 0.0
    %405 = vmatpush1.msra.mxu0 0.0
    %406 = vmatprep.subr.mxu0 0.0
    %407 = vmatpush1.msra.mxu0 0.0
    %408 = vmatprep.subr.mxu0 %v42
    %409 = vmatpush1.msra.mxu0 %v41
    %410 = vmatprep.subr.mxu0 %v40
    %411 = vmatpush1.msra.mxu0 %v39
    %412 = vmatprep.subr.mxu0 %v38
    %413 = vmatpush1.msra.mxu0 %v37
    %414 = vmatprep.subr.mxu0 %v36
    %415 = vmatpush1.msra.mxu0 %v35
    %416 = vmatprep.subr.mxu0 0.0
    %417 = vmatpush2.msra.mxu0 0.0
    %418 = vmatprep.subr.mxu0 0.0
    %419 = vmatpush2.msra.mxu0 0.0
    %420 = vmatprep.subr.mxu0 0.0
    %421 = vmatpush2.msra.mxu0 0.0
    %422 = vmatprep.subr.mxu0 0.0
    %423 = vmatpush2.msra.mxu0 0.0
    %424 = vmatprep.subr.mxu0 0.0
    %425 = vmatpush2.msra.mxu0 0.0
    %426 = vmatprep.subr.mxu0 0.0
    %427 = vmatpush2.msra.mxu0 0.0
    %428 = vmatprep.subr.mxu0 0.0
    %429 = vmatpush2.msra.mxu0 0.0
    %430 = vmatprep.subr.mxu0 0.0
    %431 = vmatpush2.msra.mxu0 0.0
    %432 = vmatprep.subr.mxu0 0.0
    %433 = vmatpush2.msra.mxu0 0.0
    %434 = vmatprep.subr.mxu0 0.0
    %435 = vmatpush2.msra.mxu0 0.0
    %436 = vmatprep.subr.mxu0 0.0
    %437 = vmatpush2.msra.mxu0 0.0
    %438 = vmatprep.subr.mxu0 0.0
    %439 = vmatpush2.msra.mxu0 0.0
    %440 = vmatprep.subr.mxu0 0.0
    %441 = vmatpush2.msra.mxu0 0.0
    %442 = vmatprep.subr.mxu0 0.0
    %443 = vmatpush2.msra.mxu0 0.0
    %444 = vmatprep.subr.mxu0 0.0
    %445 = vmatpush2.msra.mxu0 0.0
    %446 = vmatprep.subr.mxu0 0.0
    %447 = vmatpush2.msra.mxu0 0.0
    %448 = vmatprep.mubr.f32.mxu0 0.0
    %449 = vmatmul.mubr.f32.gmra.mxu0 %v290
    %v450 = vpop.f32.mrf.mxu0
    %v451 = vadd.f32 %v379, %v450
    %v452 = vpop.f32.mrf.mxu0
    %v453 = vadd.f32 %v383, %v452
    %454 = vmatprep.mubr.f32.mxu0 0.0
    %455 = vmatmul.mubr.f32.gmra.mxu0 %v293
    %v456 = vpop.f32.mrf.mxu0
    %v457 = vadd.f32 %v379, %v456
    %v458 = vpop.f32.mrf.mxu0
    %v459 = vadd.f32 %v383, %v458
    %460 = vdwg.mxu0
    %v461 = vmul.f32 %v451, %v43
    %v462 = vmul.f32 %v453, %v44
    %v463 = vmul.f32 %v457, %v45
    %v464 = vmul.f32 %v459, %v46
    %vm465 = vcmask 130048
    %v467 = vsel %vm465, %v63, 0
    %v470 = vsel %vm465, %v64, 0
    %472 = vmatprep.subr.mxu0 0.0
    %473 = vmatpush1.msra.mxu0 0.0
    %474 = vmatprep.subr.mxu0 0.0
    %475 = vmatpush1.msra.mxu0 0.0
    %476 = vmatprep.subr.mxu0 0.0
    %477 = vmatpush1.msra.mxu0 0.0
    %478 = vmatprep.subr.mxu0 0.0
    %479 = vmatpush1.msra.mxu0 0.0
    %480 = vmatprep.subr.mxu0 0.0
    %481 = vmatpush1.msra.mxu0 0.0
    %482 = vmatprep.subr.mxu0 0.0
    %483 = vmatpush1.msra.mxu0 0.0
    %484 = vmatprep.subr.mxu0 0.0
    %485 = vmatpush1.msra.mxu0 0.0
    %486 = vmatprep.subr.mxu0 0.0
    %487 = vmatpush1.msra.mxu0 0.0
    %488 = vmatprep.subr.mxu0 0.0
    %489 = vmatpush1.msra.mxu0 0.0
    %490 = vmatprep.subr.mxu0 0.0
    %491 = vmatpush1.msra.mxu0 0.0
    %492 = vmatprep.subr.mxu0 0.0
    %493 = vmatpush1.msra.mxu0 0.0
    %494 = vmatprep.subr.mxu0 0.0
    %495 = vmatpush1.msra.mxu0 0.0
    %496 = vmatprep.subr.mxu0 0.0
    %497 = vmatpush1.msra.mxu0 0.0
    %498 = vmatprep.subr.mxu0 0.0
    %499 = vmatpush1.msra.mxu0 0.0
    %500 = vmatprep.subr.mxu0 %v375
    %501 = vmatpush1.msra.mxu0 %v374
    %502 = vmatprep.subr.mxu0 %v373
    %503 = vmatpush1.msra.mxu0 %v372
    %504 = vmatprep.subr.mxu0 0.0
    %505 = vmatpush2.msra.mxu0 0.0
    %506 = vmatprep.subr.mxu0 0.0
    %507 = vmatpush2.msra.mxu0 0.0
    %508 = vmatprep.subr.mxu0 0.0
    %509 = vmatpush2.msra.mxu0 0.0
    %510 = vmatprep.subr.mxu0 0.0
    %511 = vmatpush2.msra.mxu0 0.0
    %512 = vmatprep.subr.mxu0 0.0
    %513 = vmatpush2.msra.mxu0 0.0
    %514 = vmatprep.subr.mxu0 0.0
    %515 = vmatpush2.msra.mxu0 0.0
    %516 = vmatprep.subr.mxu0 0.0
    %517 = vmatpush2.msra.mxu0 0.0
    %518 = vmatprep.subr.mxu0 0.0
    %519 = vmatpush2.msra.mxu0 0.0
    %520 = vmatprep.subr.mxu0 0.0
    %521 = vmatpush2.msra.mxu0 0.0
    %522 = vmatprep.subr.mxu0 0.0
    %523 = vmatpush2.msra.mxu0 0.0
    %524 = vmatprep.subr.mxu0 0.0
    %525 = vmatpush2.msra.mxu0 0.0
    %526 = vmatprep.subr.mxu0 0.0
    %527 = vmatpush2.msra.mxu0 0.0
    %528 = vmatprep.subr.mxu0 0.0
    %529 = vmatpush2.msra.mxu0 0.0
    %530 = vmatprep.subr.mxu0 0.0
    %531 = vmatpush2.msra.mxu0 0.0
    %532 = vmatprep.subr.mxu0 0.0
    %533 = vmatpush2.msra.mxu0 0.0
    %534 = vmatprep.subr.mxu0 0.0
    %535 = vmatpush2.msra.mxu0 0.0
    %536 = vmatprep.mubr.f32.mxu0 0.0
    %537 = vmatmul.mubr.f32.gmra.mxu0 %v467
    %v538 = vpop.f32.mrf.mxu0
    %v539 = vadd.f32 0.0, %v538
    %v540 = vpop.f32.mrf.mxu0
    %v541 = vadd.f32 0.0, %v540
    %542 = vmatprep.mubr.f32.mxu0 0.0
    %543 = vmatmul.mubr.f32.gmra.mxu0 %v470
    %v544 = vpop.f32.mrf.mxu0
    %v545 = vadd.f32 0.0, %v544
    %v546 = vpop.f32.mrf.mxu0
    %v547 = vadd.f32 0.0, %v546
    %548 = vdwg.mxu0
    %549 = vmatprep.subr.mxu0 0.0
    %550 = vmatpush1.msra.mxu0 0.0
    %551 = vmatprep.subr.mxu0 0.0
    %552 = vmatpush1.msra.mxu0 0.0
    %553 = vmatprep.subr.mxu0 0.0
    %554 = vmatpush1.msra.mxu0 0.0
    %555 = vmatprep.subr.mxu0 0.0
    %556 = vmatpush1.msra.mxu0 0.0
    %557 = vmatprep.subr.mxu0 0.0
    %558 = vmatpush1.msra.mxu0 0.0
    %559 = vmatprep.subr.mxu0 0.0
    %560 = vmatpush1.msra.mxu0 0.0
    %561 = vmatprep.subr.mxu0 0.0
    %562 = vmatpush1.msra.mxu0 0.0
    %563 = vmatprep.subr.mxu0 0.0
    %564 = vmatpush1.msra.mxu0 0.0
    %565 = vmatprep.subr.mxu0 0.0
    %566 = vmatpush1.msra.mxu0 0.0
    %567 = vmatprep.subr.mxu0 0.0
    %568 = vmatpush1.msra.mxu0 0.0
    %569 = vmatprep.subr.mxu0 0.0
    %570 = vmatpush1.msra.mxu0 0.0
    %571 = vmatprep.subr.mxu0 0.0
    %572 = vmatpush1.msra.mxu0 0.0
    %573 = vmatprep.subr.mxu0 0.0
    %574 = vmatpush1.msra.mxu0 0.0
    %575 = vmatprep.subr.mxu0 0.0
    %576 = vmatpush1.msra.mxu0 0.0
    %577 = vmatprep.subr.mxu0 %v464
    %578 = vmatpush1.msra.mxu0 %v463
    %579 = vmatprep.subr.mxu0 %v462
    %580 = vmatpush1.msra.mxu0 %v461
    %581 = vmatprep.subr.mxu0 0.0
    %582 = vmatpush2.msra.mxu0 0.0
    %583 = vmatprep.subr.mxu0 0.0
    %584 = vmatpush2.msra.mxu0 0.0
    %585 = vmatprep.subr.mxu0 0.0
    %586 = vmatpush2.msra.mxu0 0.0
    %587 = vmatprep.subr.mxu0 0.0
    %588 = vmatpush2.msra.mxu0 0.0
    %589 = vmatprep.subr.mxu0 0.0
    %590 = vmatpush2.msra.mxu0 0.0
    %591 = vmatprep.subr.mxu0 0.0
    %592 = vmatpush2.msra.mxu0 0.0
    %593 = vmatprep.subr.mxu0 0.0
    %594 = vmatpush2.msra.mxu0 0.0
    %595 = vmatprep.subr.mxu0 0.0
    %596 = vmatpush2.msra.mxu0 0.0
    %597 = vmatprep.subr.mxu0 0.0
    %598 = vmatpush2.msra.mxu0 0.0
    %599 = vmatprep.subr.mxu0 0.0
    %600 = vmatpush2.msra.mxu0 0.0
    %601 = vmatprep.subr.mxu0 0.0
    %602 = vmatpush2.msra.mxu0 0.0
    %603 = vmatprep.subr.mxu0 0.0
    %604 = vmatpush2.msra.mxu0 0.0
    %605 = vmatprep.subr.mxu0 0.0
    %606 = vmatpush2.msra.mxu0 0.0
    %607 = vmatprep.subr.mxu0 0.0
    %608 = vmatpush2.msra.mxu0 0.0
    %609 = vmatprep.subr.mxu0 0.0
    %610 = vmatpush2.msra.mxu0 0.0
    %611 = vmatprep.subr.mxu0 0.0
    %612 = vmatpush2.msra.mxu0 0.0
    %613 = vmatprep.mubr.f32.mxu0 0.0
    %614 = vmatmul.mubr.f32.gmra.mxu0 %v467
    %v615 = vpop.f32.mrf.mxu0
    %v616 = vadd.f32 0.0, %v615
    %v617 = vpop.f32.mrf.mxu0
    %v618 = vadd.f32 0.0, %v617
    %619 = vmatprep.mubr.f32.mxu0 0.0
    %620 = vmatmul.mubr.f32.gmra.mxu0 %v470
    %v621 = vpop.f32.mrf.mxu0
    %v622 = vadd.f32 0.0, %v621
    %v623 = vpop.f32.mrf.mxu0
    %v624 = vadd.f32 0.0, %v623
    %625 = vdwg.mxu0
    %v626 = vmul.f32 %v271, %v539
    %v627 = vmul.f32 %v273, %v541
    %v628 = vmul.f32 %v277, %v545
    %v629 = vmul.f32 %v279, %v547
    %630 = vmatprep.subr.mxu0 0.0
    %631 = vmatpush1.msra.mxu0 %v83
    %632 = vmatprep.subr.mxu0 0.0
    %633 = vmatpush1.msra.mxu0 %v82
    %634 = vmatprep.subr.mxu0 0.0
    %635 = vmatpush1.msra.mxu0 %v81
    %636 = vmatprep.subr.mxu0 0.0
    %637 = vmatpush1.msra.mxu0 %v80
    %638 = vmatprep.subr.mxu0 0.0
    %639 = vmatpush1.msra.mxu0 %v79
    %640 = vmatprep.subr.mxu0 0.0
    %641 = vmatpush1.msra.mxu0 %v78
    %642 = vmatprep.subr.mxu0 0.0
    %643 = vmatpush1.msra.mxu0 %v77
    %644 = vmatprep.subr.mxu0 0.0
    %645 = vmatpush1.msra.mxu0 %v76
    %646 = vmatprep.subr.mxu0 0.0
    %647 = vmatpush1.msra.mxu0 %v75
    %648 = vmatprep.subr.mxu0 0.0
    %649 = vmatpush1.msra.mxu0 %v74
    %650 = vmatprep.subr.mxu0 0.0
    %651 = vmatpush1.msra.mxu0 %v73
    %652 = vmatprep.subr.mxu0 0.0
    %653 = vmatpush1.msra.mxu0 %v72
    %654 = vmatprep.subr.mxu0 0.0
    %655 = vmatpush1.msra.mxu0 %v71
    %656 = vmatprep.subr.mxu0 0.0
    %657 = vmatpush1.msra.mxu0 %v70
    %658 = vmatprep.subr.mxu0 0.0
    %659 = vmatpush1.msra.mxu0 %v69
    %660 = vmatprep.subr.mxu0 0.0
    %661 = vmatpush1.msra.mxu0 %v68
    %662 = vmatprep.subr.mxu0 0.0
    %663 = vmatpush2.msra.mxu0 %v99
    %664 = vmatprep.subr.mxu0 0.0
    %665 = vmatpush2.msra.mxu0 %v98
    %666 = vmatprep.subr.mxu0 0.0
    %667 = vmatpush2.msra.mxu0 %v97
    %668 = vmatprep.subr.mxu0 0.0
    %669 = vmatpush2.msra.mxu0 %v96
    %670 = vmatprep.subr.mxu0 0.0
    %671 = vmatpush2.msra.mxu0 %v95
    %672 = vmatprep.subr.mxu0 0.0
    %673 = vmatpush2.msra.mxu0 %v94
    %674 = vmatprep.subr.mxu0 0.0
    %675 = vmatpush2.msra.mxu0 %v93
    %676 = vmatprep.subr.mxu0 0.0
    %677 = vmatpush2.msra.mxu0 %v92
    %678 = vmatprep.subr.mxu0 0.0
    %679 = vmatpush2.msra.mxu0 %v91
    %680 = vmatprep.subr.mxu0 0.0
    %681 = vmatpush2.msra.mxu0 %v90
    %682 = vmatprep.subr.mxu0 0.0
    %683 = vmatpush2.msra.mxu0 %v89
    %684 = vmatprep.subr.mxu0 0.0
    %685 = vmatpush2.msra.mxu0 %v88
    %686 = vmatprep.subr.mxu0 0.0
    %687 = vmatpush2.msra.mxu0 %v87
    %688 = vmatprep.subr.mxu0 0.0
    %689 = vmatpush2.msra.mxu0 %v86
    %690 = vmatprep.subr.mxu0 0.0
    %691 = vmatpush2.msra.mxu0 %v85
    %692 = vmatprep.subr.mxu0 0.0
    %693 = vmatpush2.msra.mxu0 %v84
    %694 = vmatprep.mubr.f32.mxu0 %v627
    %695 = vmatmul.mubr.f32.gmra.mxu0 %v626
    %v696 = vpop.f32.mrf.mxu0
    %v697 = vadd.f32 0.0, %v696
    %v698 = vpop.f32.mrf.mxu0
    %699 = vmatprep.mubr.f32.mxu0 %v629
    %700 = vmatmul.mubr.f32.gmra.mxu0 %v628
    %v701 = vpop.f32.mrf.mxu0
    %v702 = vadd.f32 0.0, %v701
    %v703 = vpop.f32.mrf.mxu0
    %704 = vdwg.mxu0
    %vm705 = vcmask 523264
    %v706 = vsel %vm705, %v697, -inf
    %707 = vmax.xlane.f32.xlu0 %v706
    %v708 = vpop.xlane.xlu0 %707
    %v709 = vsel %vm705, %v702, -inf
    %710 = vmax.xlane.f32.xlu0 %v709
    %v711 = vpop.xlane.xlu0 %710
    %v712 = vsub.f32 %v697, %v708
    %v713 = vsub.f32 %v702, %v711
    %v714 = vmul.f32 %v712, 1.442695
    %v715 = vpow.pop %v714
    %v716 = vmul.f32 %v713, 1.442695
    %v717 = vpow.pop %v716
    %v719 = vsel %vm705, %v715, 0
    %v722 = vsel %vm705, %v717, 0
    %724 = vmatprep.subr.mxu0 0.0
    %725 = vmatpush1.msra.mxu0 0.0
    %726 = vmatprep.subr.mxu0 0.0
    %727 = vmatpush1.msra.mxu0 0.0
    %728 = vmatprep.subr.mxu0 0.0
    %729 = vmatpush1.msra.mxu0 0.0
    %730 = vmatprep.subr.mxu0 0.0
    %731 = vmatpush1.msra.mxu0 0.0
    %732 = vmatprep.subr.mxu0 0.0
    %733 = vmatpush1.msra.mxu0 0.0
    %734 = vmatprep.subr.mxu0 0.0
    %735 = vmatpush1.msra.mxu0 0.0
    %736 = vmatprep.subr.mxu0 0.0
    %737 = vmatpush1.msra.mxu0 0.0
    %738 = vmatprep.subr.mxu0 0.0
    %739 = vmatpush1.msra.mxu0 0.0
    %740 = vmatprep.subr.mxu0 %v62
    %741 = vmatpush1.msra.mxu0 %v61
    %742 = vmatprep.subr.mxu0 %v60
    %743 = vmatpush1.msra.mxu0 %v59
    %744 = vmatprep.subr.mxu0 %v58
    %745 = vmatpush1.msra.mxu0 %v57
    %746 = vmatprep.subr.mxu0 %v56
    %747 = vmatpush1.msra.mxu0 %v55
    %748 = vmatprep.subr.mxu0 %v54
    %749 = vmatpush1.msra.mxu0 %v53
    %750 = vmatprep.subr.mxu0 %v52
    %751 = vmatpush1.msra.mxu0 %v51
    %752 = vmatprep.subr.mxu0 %v50
    %753 = vmatpush1.msra.mxu0 %v49
    %754 = vmatprep.subr.mxu0 %v48
    %755 = vmatpush1.msra.mxu0 %v47
    %756 = vmatprep.subr.mxu0 0.0
    %757 = vmatpush2.msra.mxu0 0.0
    %758 = vmatprep.subr.mxu0 0.0
    %759 = vmatpush2.msra.mxu0 0.0
    %760 = vmatprep.subr.mxu0 0.0
    %761 = vmatpush2.msra.mxu0 0.0
    %762 = vmatprep.subr.mxu0 0.0
    %763 = vmatpush2.msra.mxu0 0.0
    %764 = vmatprep.subr.mxu0 0.0
    %765 = vmatpush2.msra.mxu0 0.0
    %766 = vmatprep.subr.mxu0 0.0
    %767 = vmatpush2.msra.mxu0 0.0
    %768 = vmatprep.subr.mxu0 0.0
    %769 = vmatpush2.msra.mxu0 0.0
    %770 = vmatprep.subr.mxu0 0.0
    %771 = vmatpush2.msra.mxu0 0.0
    %772 = vmatprep.subr.mxu0 0.0
    %773 = vmatpush2.msra.mxu0 0.0
    %774 = vmatprep.subr.mxu0 0.0
    %775 = vmatpush2.msra.mxu0 0.0
    %776 = vmatprep.subr.mxu0 0.0
    %777 = vmatpush2.msra.mxu0 0.0
    %778 = vmatprep.subr.mxu0 0.0
    %779 = vmatpush2.msra.mxu0 0.0
    %780 = vmatprep.subr.mxu0 0.0
    %781 = vmatpush2.msra.mxu0 0.0
    %782 = vmatprep.subr.mxu0 0.0
    %783 = vmatpush2.msra.mxu0 0.0
    %784 = vmatprep.subr.mxu0 0.0
    %785 = vmatpush2.msra.mxu0 0.0
    %786 = vmatprep.subr.mxu0 0.0
    %787 = vmatpush2.msra.mxu0 0.0
    %788 = vmatprep.mubr.f32.mxu0 0.0
    %789 = vmatmul.mubr.f32.gmra.mxu0 %v719
    %v790 = vpop.f32.mrf.mxu0
    %v791 = vadd.f32 0.0, %v790
    %v792 = vpop.f32.mrf.mxu0
    %v793 = vadd.f32 0.0, %v792
    %794 = vmatprep.mubr.f32.mxu0 0.0
    %795 = vmatmul.mubr.f32.gmra.mxu0 %v722
    %v796 = vpop.f32.mrf.mxu0
    %v797 = vadd.f32 0.0, %v796
    %v798 = vpop.f32.mrf.mxu0
    %v799 = vadd.f32 0.0, %v798
    %800 = vdwg.mxu0
    %v801 = vmul.f32 %v791, %v616
    %v802 = vmul.f32 %v793, %v618
    %v803 = vmul.f32 %v797, %v622
    %v804 = vmul.f32 %v799, %v624
    %805 = vmatprep.subr.mxu0 0.0
    %806 = vmatpush1.msra.mxu0 %v115
    %807 = vmatprep.subr.mxu0 0.0
    %808 = vmatpush1.msra.mxu0 %v114
    %809 = vmatprep.subr.mxu0 0.0
    %810 = vmatpush1.msra.mxu0 %v113
    %811 = vmatprep.subr.mxu0 0.0
    %812 = vmatpush1.msra.mxu0 %v112
    %813 = vmatprep.subr.mxu0 0.0
    %814 = vmatpush1.msra.mxu0 %v111
    %815 = vmatprep.subr.mxu0 0.0
    %816 = vmatpush1.msra.mxu0 %v110
    %817 = vmatprep.subr.mxu0 0.0
    %818 = vmatpush1.msra.mxu0 %v109
    %819 = vmatprep.subr.mxu0 0.0
    %820 = vmatpush1.msra.mxu0 %v108
    %821 = vmatprep.subr.mxu0 0.0
    %822 = vmatpush1.msra.mxu0 %v107
    %823 = vmatprep.subr.mxu0 0.0
    %824 = vmatpush1.msra.mxu0 %v106
    %825 = vmatprep.subr.mxu0 0.0
    %826 = vmatpush1.msra.mxu0 %v105
    %827 = vmatprep.subr.mxu0 0.0
    %828 = vmatpush1.msra.mxu0 %v104
    %829 = vmatprep.subr.mxu0 0.0
    %830 = vmatpush1.msra.mxu0 %v103
    %831 = vmatprep.subr.mxu0 0.0
    %832 = vmatpush1.msra.mxu0 %v102
    %833 = vmatprep.subr.mxu0 0.0
    %834 = vmatpush1.msra.mxu0 %v101
    %835 = vmatprep.subr.mxu0 0.0
    %836 = vmatpush1.msra.mxu0 %v100
    %837 = vmatprep.subr.mxu0 0.0
    %838 = vmatpush2.msra.mxu0 %v131
    %839 = vmatprep.subr.mxu0 0.0
    %840 = vmatpush2.msra.mxu0 %v130
    %841 = vmatprep.subr.mxu0 0.0
    %842 = vmatpush2.msra.mxu0 %v129
    %843 = vmatprep.subr.mxu0 0.0
    %844 = vmatpush2.msra.mxu0 %v128
    %845 = vmatprep.subr.mxu0 0.0
    %846 = vmatpush2.msra.mxu0 %v127
    %847 = vmatprep.subr.mxu0 0.0
    %848 = vmatpush2.msra.mxu0 %v126
    %849 = vmatprep.subr.mxu0 0.0
    %850 = vmatpush2.msra.mxu0 %v125
    %851 = vmatprep.subr.mxu0 0.0
    %852 = vmatpush2.msra.mxu0 %v124
    %853 = vmatprep.subr.mxu0 0.0
    %854 = vmatpush2.msra.mxu0 %v123
    %855 = vmatprep.subr.mxu0 0.0
    %856 = vmatpush2.msra.mxu0 %v122
    %857 = vmatprep.subr.mxu0 0.0
    %858 = vmatpush2.msra.mxu0 %v121
    %859 = vmatprep.subr.mxu0 0.0
    %860 = vmatpush2.msra.mxu0 %v120
    %861 = vmatprep.subr.mxu0 0.0
    %862 = vmatpush2.msra.mxu0 %v119
    %863 = vmatprep.subr.mxu0 0.0
    %864 = vmatpush2.msra.mxu0 %v118
    %865 = vmatprep.subr.mxu0 0.0
    %866 = vmatpush2.msra.mxu0 %v117
    %867 = vmatprep.subr.mxu0 0.0
    %868 = vmatpush2.msra.mxu0 %v116
    %869 = vmatprep.mubr.f32.mxu0 %v802
    %870 = vmatmul.mubr.f32.gmra.mxu0 %v801
    %v871 = vpop.f32.mrf.mxu0
    %v872 = vadd.f32 0.0, %v871
    %v873 = vpop.f32.mrf.mxu0
    %874 = vmatprep.mubr.f32.mxu0 %v804
    %875 = vmatmul.mubr.f32.gmra.mxu0 %v803
    %v876 = vpop.f32.mrf.mxu0
    %v877 = vadd.f32 0.0, %v876
    %v878 = vpop.f32.mrf.mxu0
    %879 = vdwg.mxu0
    %880 = vmatprep.subr.mxu0 0.0
    %881 = vmatpush1.msra.mxu0 %v115
    %882 = vmatprep.subr.mxu0 0.0
    %883 = vmatpush1.msra.mxu0 %v114
    %884 = vmatprep.subr.mxu0 0.0
    %885 = vmatpush1.msra.mxu0 %v113
    %886 = vmatprep.subr.mxu0 0.0
    %887 = vmatpush1.msra.mxu0 %v112
    %888 = vmatprep.subr.mxu0 0.0
    %889 = vmatpush1.msra.mxu0 %v111
    %890 = vmatprep.subr.mxu0 0.0
    %891 = vmatpush1.msra.mxu0 %v110
    %892 = vmatprep.subr.mxu0 0.0
    %893 = vmatpush1.msra.mxu0 %v109
    %894 = vmatprep.subr.mxu0 0.0
    %895 = vmatpush1.msra.mxu0 %v108
    %896 = vmatprep.subr.mxu0 0.0
    %897 = vmatpush1.msra.mxu0 %v107
    %898 = vmatprep.subr.mxu0 0.0
    %899 = vmatpush1.msra.mxu0 %v106
    %900 = vmatprep.subr.mxu0 0.0
    %901 = vmatpush1.msra.mxu0 %v105
    %902 = vmatprep.subr.mxu0 0.0
    %903 = vmatpush1.msra.mxu0 %v104
    %904 = vmatprep.subr.mxu0 0.0
    %905 = vmatpush1.msra.mxu0 %v103
    %906 = vmatprep.subr.mxu0 0.0
    %907 = vmatpush1.msra.mxu0 %v102
    %908 = vmatprep.subr.mxu0 0.0
    %909 = vmatpush1.msra.mxu0 %v101
    %910 = vmatprep.subr.mxu0 0.0
    %911 = vmatpush1.msra.mxu0 %v100
    %912 = vmatprep.subr.mxu0 0.0
    %913 = vmatpush2.msra.mxu0 %v131
    %914 = vmatprep.subr.mxu0 0.0
    %915 = vmatpush2.msra.mxu0 %v130
    %916 = vmatprep.subr.mxu0 0.0
    %917 = vmatpush2.msra.mxu0 %v129
    %918 = vmatprep.subr.mxu0 0.0
    %919 = vmatpush2.msra.mxu0 %v128
    %920 = vmatprep.subr.mxu0 0.0
    %921 = vmatpush2.msra.mxu0 %v127
    %922 = vmatprep.subr.mxu0 0.0
    %923 = vmatpush2.msra.mxu0 %v126
    %924 = vmatprep.subr.mxu0 0.0
    %925 = vmatpush2.msra.mxu0 %v125
    %926 = vmatprep.subr.mxu0 0.0
    %927 = vmatpush2.msra.mxu0 %v124
    %928 = vmatprep.subr.mxu0 0.0
    %929 = vmatpush2.msra.mxu0 %v123
    %930 = vmatprep.subr.mxu0 0.0
    %931 = vmatpush2.msra.mxu0 %v122
    %932 = vmatprep.subr.mxu0 0.0
    %933 = vmatpush2.msra.mxu0 %v121
    %934 = vmatprep.subr.mxu0 0.0
    %935 = vmatpush2.msra.mxu0 %v120
    %936 = vmatprep.subr.mxu0 0.0
    %937 = vmatpush2.msra.mxu0 %v119
    %938 = vmatprep.subr.mxu0 0.0
    %939 = vmatpush2.msra.mxu0 %v118
    %940 = vmatprep.subr.mxu0 0.0
    %941 = vmatpush2.msra.mxu0 %v117
    %942 = vmatprep.subr.mxu0 0.0
    %943 = vmatpush2.msra.mxu0 %v116
    %944 = vmatprep.mubr.f32.mxu0 %v793
    %945 = vmatmul.mubr.f32.gmra.mxu0 %v791
    %v946 = vpop.f32.mrf.mxu0
    %v947 = vadd.f32 0.0, %v946
    %v948 = vpop.f32.mrf.mxu0
    %949 = vmatprep.mubr.f32.mxu0 %v799
    %950 = vmatmul.mubr.f32.gmra.mxu0 %v797
    %v951 = vpop.f32.mrf.mxu0
    %v952 = vadd.f32 0.0, %v951
    %v953 = vpop.f32.mrf.mxu0
    %954 = vdwg.mxu0
    %v955 = vrcp.pop %v947
    %v956 = vmul.f32 %v872, %v955
    %v957 = vrcp.pop %v952
    %v958 = vmul.f32 %v877, %v957
    %v960 = vsel %vm150, %v956, 0
    %v963 = vsel %vm150, %v958, 0
    %965 = vmatprep.subr.mxu0 0.0
    %966 = vmatpush1.msra.mxu0 0.0
    %967 = vmatprep.subr.mxu0 0.0
    %968 = vmatpush1.msra.mxu0 0.0
    %969 = vmatprep.subr.mxu0 0.0
    %970 = vmatpush1.msra.mxu0 0.0
    %971 = vmatprep.subr.mxu0 0.0
    %972 = vmatpush1.msra.mxu0 0.0
    %973 = vmatprep.subr.mxu0 0.0
    %974 = vmatpush1.msra.mxu0 0.0
    %975 = vmatprep.subr.mxu0 0.0
    %976 = vmatpush1.msra.mxu0 0.0
    %977 = vmatprep.subr.mxu0 0.0
    %978 = vmatpush1.msra.mxu0 0.0
    %979 = vmatprep.subr.mxu0 0.0
    %980 = vmatpush1.msra.mxu0 0.0
    %981 = vmatprep.subr.mxu0 0.0
    %982 = vmatpush1.msra.mxu0 0.0
    %983 = vmatprep.subr.mxu0 0.0
    %984 = vmatpush1.msra.mxu0 0.0
    %985 = vmatprep.subr.mxu0 0.0
    %986 = vmatpush1.msra.mxu0 0.0
    %987 = vmatprep.subr.mxu0 0.0
    %988 = vmatpush1.msra.mxu0 0.0
    %989 = vmatprep.subr.mxu0 0.0
    %990 = vmatpush1.msra.mxu0 %v139
    %991 = vmatprep.subr.mxu0 0.0
    %992 = vmatpush1.msra.mxu0 %v138
    %993 = vmatprep.subr.mxu0 0.0
    %994 = vmatpush1.msra.mxu0 %v137
    %995 = vmatprep.subr.mxu0 0.0
    %996 = vmatpush1.msra.mxu0 %v136
    %997 = vmatprep.subr.mxu0 0.0
    %998 = vmatpush2.msra.mxu0 0.0
    %999 = vmatprep.subr.mxu0 0.0
    %1000 = vmatpush2.msra.mxu0 0.0
    %1001 = vmatprep.subr.mxu0 0.0
    %1002 = vmatpush2.msra.mxu0 0.0
    %1003 = vmatprep.subr.mxu0 0.0
    %1004 = vmatpush2.msra.mxu0 0.0
    %1005 = vmatprep.subr.mxu0 0.0
    %1006 = vmatpush2.msra.mxu0 0.0
    %1007 = vmatprep.subr.mxu0 0.0
    %1008 = vmatpush2.msra.mxu0 0.0
    %1009 = vmatprep.subr.mxu0 0.0
    %1010 = vmatpush2.msra.mxu0 0.0
    %1011 = vmatprep.subr.mxu0 0.0
    %1012 = vmatpush2.msra.mxu0 0.0
    %1013 = vmatprep.subr.mxu0 0.0
    %1014 = vmatpush2.msra.mxu0 0.0
    %1015 = vmatprep.subr.mxu0 0.0
    %1016 = vmatpush2.msra.mxu0 0.0
    %1017 = vmatprep.subr.mxu0 0.0
    %1018 = vmatpush2.msra.mxu0 0.0
    %1019 = vmatprep.subr.mxu0 0.0
    %1020 = vmatpush2.msra.mxu0 0.0
    %1021 = vmatprep.subr.mxu0 0.0
    %1022 = vmatpush2.msra.mxu0 0.0
    %1023 = vmatprep.subr.mxu0 0.0
    %1024 = vmatpush2.msra.mxu0 0.0
    %1025 = vmatprep.subr.mxu0 0.0
    %1026 = vmatpush2.msra.mxu0 0.0
    %1027 = vmatprep.subr.mxu0 0.0
    %1028 = vmatpush2.msra.mxu0 0.0
    %1029 = vmatprep.mubr.f32.mxu0 0.0
    %1030 = vmatmul.mubr.f32.gmra.mxu0 %v960
    %v1031 = vpop.f32.mrf.mxu0
    %v1032 = vadd.f32 0.0, %v1031
    %v1033 = vpop.f32.mrf.mxu0
    %1034 = vmatprep.mubr.f32.mxu0 0.0
    %1035 = vmatmul.mubr.f32.gmra.mxu0 %v963
    %v1036 = vpop.f32.mrf.mxu0
    %v1037 = vadd.f32 0.0, %v1036
    %v1038 = vpop.f32.mrf.mxu0
    %1039 = vdwg.mxu0
    %v1040 = vlaneseq
    %v1041 = vshrl.u32 %v1040, 7
    %v1042 = vsub.s32 3, %v1041
    %v1043 = vrot.slane %v65, %v1042
    %v1044 = vadd.f32 %v1032, %v1043
    %v1045 = vadd.f32 %v1037, %v1043
    %v1046 = vadd.f32 %v188, %v1044
    %v1047 = vadd.f32 %v189, %v1045
    %v1048 = vsel %vm150, %v1046, 0.0
    %1049 = vadd.xlane.f32.xlu0 %v1048
    %v1050 = vpop.xlane.xlu0 %1049
    %v1051 = vsel %vm150, %v1047, 0.0
    %1052 = vadd.xlane.f32.xlu0 %v1051
    %v1053 = vpop.xlane.xlu0 %1052
    %v1054 = vmul.f32 %v1050, %v157
    %v1055 = vmul.f32 %v1053, %v157
    %v1056 = vsub.f32 %v1046, %v1054
    %v1057 = vsub.f32 %v1047, %v1055
    %v1058 = vmul.f32 %v1056, %v1056
    %v1059 = vmul.f32 %v1057, %v1057
    %v1060 = vsel %vm150, %v1058, 0.0
    %1061 = vadd.xlane.f32.xlu0 %v1060
    %v1062 = vpop.xlane.xlu0 %1061
    %v1063 = vsel %vm150, %v1059, 0.0
    %1064 = vadd.xlane.f32.xlu0 %v1063
    %v1065 = vpop.xlane.xlu0 %1064
    %v1066 = vmul.f32 %v1062, %v157
    %v1067 = vmul.f32 %v1065, %v157
    %v1068 = vadd.f32 %v1066, 1e-05
    %v1069 = vadd.f32 %v1067, 1e-05
    %v1070 = vrsqrt.pop %v1068
    %v1071 = vrsqrt.pop %v1069
    %v1072 = vmul.f32 %v1056, %v1070
    %v1073 = vmul.f32 %v1057, %v1071
    %v1074 = vlaneseq
    %v1075 = vshrl.u32 %v1074, 7
    %v1076 = vsub.s32 0, %v1075
    %v1077 = vrot.slane %v67, %v1076
    %v1078 = vmul.f32 %v1072, %v1077
    %v1079 = vmul.f32 %v1073, %v1077
    %v1080 = vlaneseq
    %v1081 = vshrl.u32 %v1080, 7
    %v1082 = vsub.s32 1, %v1081
    %v1083 = vrot.slane %v67, %v1082
    %v1084 = vadd.f32 %v1078, %v1083
    %v1085 = vadd.f32 %v1079, %v1083
    %v1086 = vlaneseq
    %v1087 = vshrl.u32 %v1086, 7
    %v1088 = vsub.s32 4, %v1087
    %v1089 = vrot.slane %v65, %v1088
    %v1091 = vsel %vm150, %v1084, 0
    %v1094 = vsel %vm150, %v1085, 0
    %1096 = vmatprep.subr.mxu0 0.0
    %1097 = vmatpush1.msra.mxu0 0.0
    %1098 = vmatprep.subr.mxu0 0.0
    %1099 = vmatpush1.msra.mxu0 0.0
    %1100 = vmatprep.subr.mxu0 0.0
    %1101 = vmatpush1.msra.mxu0 0.0
    %1102 = vmatprep.subr.mxu0 0.0
    %1103 = vmatpush1.msra.mxu0 0.0
    %1104 = vmatprep.subr.mxu0 0.0
    %1105 = vmatpush1.msra.mxu0 0.0
    %1106 = vmatprep.subr.mxu0 0.0
    %1107 = vmatpush1.msra.mxu0 0.0
    %1108 = vmatprep.subr.mxu0 0.0
    %1109 = vmatpush1.msra.mxu0 0.0
    %1110 = vmatprep.subr.mxu0 0.0
    %1111 = vmatpush1.msra.mxu0 0.0
    %1112 = vmatprep.subr.mxu0 0.0
    %1113 = vmatpush1.msra.mxu0 0.0
    %1114 = vmatprep.subr.mxu0 0.0
    %1115 = vmatpush1.msra.mxu0 0.0
    %1116 = vmatprep.subr.mxu0 0.0
    %1117 = vmatpush1.msra.mxu0 0.0
    %1118 = vmatprep.subr.mxu0 0.0
    %1119 = vmatpush1.msra.mxu0 0.0
    %1120 = vmatprep.subr.mxu0 0.0
    %1121 = vmatpush1.msra.mxu0 %v135
    %1122 = vmatprep.subr.mxu0 0.0
    %1123 = vmatpush1.msra.mxu0 %v134
    %1124 = vmatprep.subr.mxu0 0.0
    %1125 = vmatpush1.msra.mxu0 %v133
    %1126 = vmatprep.subr.mxu0 0.0
    %1127 = vmatpush1.msra.mxu0 %v132
    %1128 = vmatprep.subr.mxu0 0.0
    %1129 = vmatpush2.msra.mxu0 0.0
    %1130 = vmatprep.subr.mxu0 0.0
    %1131 = vmatpush2.msra.mxu0 0.0
    %1132 = vmatprep.subr.mxu0 0.0
    %1133 = vmatpush2.msra.mxu0 0.0
    %1134 = vmatprep.subr.mxu0 0.0
    %1135 = vmatpush2.msra.mxu0 0.0
    %1136 = vmatprep.subr.mxu0 0.0
    %1137 = vmatpush2.msra.mxu0 0.0
    %1138 = vmatprep.subr.mxu0 0.0
    %1139 = vmatpush2.msra.mxu0 0.0
    %1140 = vmatprep.subr.mxu0 0.0
    %1141 = vmatpush2.msra.mxu0 0.0
    %1142 = vmatprep.subr.mxu0 0.0
    %1143 = vmatpush2.msra.mxu0 0.0
    %1144 = vmatprep.subr.mxu0 0.0
    %1145 = vmatpush2.msra.mxu0 0.0
    %1146 = vmatprep.subr.mxu0 0.0
    %1147 = vmatpush2.msra.mxu0 0.0
    %1148 = vmatprep.subr.mxu0 0.0
    %1149 = vmatpush2.msra.mxu0 0.0
    %1150 = vmatprep.subr.mxu0 0.0
    %1151 = vmatpush2.msra.mxu0 0.0
    %1152 = vmatprep.subr.mxu0 0.0
    %1153 = vmatpush2.msra.mxu0 0.0
    %1154 = vmatprep.subr.mxu0 0.0
    %1155 = vmatpush2.msra.mxu0 0.0
    %1156 = vmatprep.subr.mxu0 0.0
    %1157 = vmatpush2.msra.mxu0 0.0
    %1158 = vmatprep.subr.mxu0 0.0
    %1159 = vmatpush2.msra.mxu0 0.0
    %1160 = vmatprep.mubr.f32.mxu0 0.0
    %1161 = vmatmul.mubr.f32.gmra.mxu0 %v1091
    %v1162 = vpop.f32.mrf.mxu0
    %v1163 = vadd.f32 %v1089, %v1162
    %v1164 = vpop.f32.mrf.mxu0
    %1165 = vmatprep.mubr.f32.mxu0 0.0
    %1166 = vmatmul.mubr.f32.gmra.mxu0 %v1094
    %v1167 = vpop.f32.mrf.mxu0
    %v1168 = vadd.f32 %v1089, %v1167
    %v1169 = vpop.f32.mrf.mxu0
    %1170 = vdwg.mxu0
    %v1171 = vmax.f32 %v1163, 0.0
    %v1172 = vmax.f32 %v1168, 0.0
    %v1174 = vsel %vm705, %v1171, 0
    %v1177 = vsel %vm705, %v1172, 0
    %1179 = vmatprep.subr.mxu0 0.0
    %1180 = vmatpush1.msra.mxu0 0.0
    %1181 = vmatprep.subr.mxu0 0.0
    %1182 = vmatpush1.msra.mxu0 0.0
    %1183 = vmatprep.subr.mxu0 0.0
    %1184 = vmatpush1.msra.mxu0 0.0
    %1185 = vmatprep.subr.mxu0 0.0
    %1186 = vmatpush1.msra.mxu0 0.0
    %1187 = vmatprep.subr.mxu0 0.0
    %1188 = vmatpush1.msra.mxu0 0.0
    %1189 = vmatprep.subr.mxu0 0.0
    %1190 = vmatpush1.msra.mxu0 0.0
    %1191 = vmatprep.subr.mxu0 0.0
    %1192 = vmatpush1.msra.mxu0 0.0
    %1193 = vmatprep.subr.mxu0 0.0
    %1194 = vmatpush1.msra.mxu0 0.0
    %1195 = vmatprep.subr.mxu0 0.0
    %1196 = vmatpush1.msra.mxu0 %v147
    %1197 = vmatprep.subr.mxu0 0.0
    %1198 = vmatpush1.msra.mxu0 %v146
    %1199 = vmatprep.subr.mxu0 0.0
    %1200 = vmatpush1.msra.mxu0 %v145
    %1201 = vmatprep.subr.mxu0 0.0
    %1202 = vmatpush1.msra.mxu0 %v144
    %1203 = vmatprep.subr.mxu0 0.0
    %1204 = vmatpush1.msra.mxu0 %v143
    %1205 = vmatprep.subr.mxu0 0.0
    %1206 = vmatpush1.msra.mxu0 %v142
    %1207 = vmatprep.subr.mxu0 0.0
    %1208 = vmatpush1.msra.mxu0 %v141
    %1209 = vmatprep.subr.mxu0 0.0
    %1210 = vmatpush1.msra.mxu0 %v140
    %1211 = vmatprep.subr.mxu0 0.0
    %1212 = vmatpush2.msra.mxu0 0.0
    %1213 = vmatprep.subr.mxu0 0.0
    %1214 = vmatpush2.msra.mxu0 0.0
    %1215 = vmatprep.subr.mxu0 0.0
    %1216 = vmatpush2.msra.mxu0 0.0
    %1217 = vmatprep.subr.mxu0 0.0
    %1218 = vmatpush2.msra.mxu0 0.0
    %1219 = vmatprep.subr.mxu0 0.0
    %1220 = vmatpush2.msra.mxu0 0.0
    %1221 = vmatprep.subr.mxu0 0.0
    %1222 = vmatpush2.msra.mxu0 0.0
    %1223 = vmatprep.subr.mxu0 0.0
    %1224 = vmatpush2.msra.mxu0 0.0
    %1225 = vmatprep.subr.mxu0 0.0
    %1226 = vmatpush2.msra.mxu0 0.0
    %1227 = vmatprep.subr.mxu0 0.0
    %1228 = vmatpush2.msra.mxu0 0.0
    %1229 = vmatprep.subr.mxu0 0.0
    %1230 = vmatpush2.msra.mxu0 0.0
    %1231 = vmatprep.subr.mxu0 0.0
    %1232 = vmatpush2.msra.mxu0 0.0
    %1233 = vmatprep.subr.mxu0 0.0
    %1234 = vmatpush2.msra.mxu0 0.0
    %1235 = vmatprep.subr.mxu0 0.0
    %1236 = vmatpush2.msra.mxu0 0.0
    %1237 = vmatprep.subr.mxu0 0.0
    %1238 = vmatpush2.msra.mxu0 0.0
    %1239 = vmatprep.subr.mxu0 0.0
    %1240 = vmatpush2.msra.mxu0 0.0
    %1241 = vmatprep.subr.mxu0 0.0
    %1242 = vmatpush2.msra.mxu0 0.0
    %1243 = vmatprep.mubr.f32.mxu0 0.0
    %1244 = vmatmul.mubr.f32.gmra.mxu0 %v1174
    %v1245 = vpop.f32.mrf.mxu0
    %v1246 = vadd.f32 0.0, %v1245
    %v1247 = vpop.f32.mrf.mxu0
    %1248 = vmatprep.mubr.f32.mxu0 0.0
    %1249 = vmatmul.mubr.f32.gmra.mxu0 %v1177
    %v1250 = vpop.f32.mrf.mxu0
    %v1251 = vadd.f32 0.0, %v1250
    %v1252 = vpop.f32.mrf.mxu0
    %1253 = vdwg.mxu0
    %v1254 = vlaneseq
    %v1255 = vshrl.u32 %v1254, 7
    %v1256 = vsub.s32 5, %v1255
    %v1257 = vrot.slane %v65, %v1256
    %v1258 = vadd.f32 %v1246, %v1257
    %v1259 = vadd.f32 %v1251, %v1257
    %v1260 = vadd.f32 %v1084, %v1258
    %v1261 = vadd.f32 %v1085, %v1259
    %v1262 = vsel %vm150, %v1260, 0.0
    %1263 = vadd.xlane.f32.xlu0 %v1262
    %v1264 = vpop.xlane.xlu0 %1263
    %v1265 = vsel %vm150, %v1261, 0.0
    %1266 = vadd.xlane.f32.xlu0 %v1265
    %v1267 = vpop.xlane.xlu0 %1266
    %v1268 = vmul.f32 %v1264, %v157
    %v1269 = vmul.f32 %v1267, %v157
    %v1270 = vsub.f32 %v1260, %v1268
    %v1271 = vsub.f32 %v1261, %v1269
    %v1272 = vmul.f32 %v1270, %v1270
    %v1273 = vmul.f32 %v1271, %v1271
    %v1274 = vsel %vm150, %v1272, 0.0
    %1275 = vadd.xlane.f32.xlu0 %v1274
    %v1276 = vpop.xlane.xlu0 %1275
    %v1277 = vsel %vm150, %v1273, 0.0
    %1278 = vadd.xlane.f32.xlu0 %v1277
    %v1279 = vpop.xlane.xlu0 %1278
    %v1280 = vmul.f32 %v1276, %v157
    %v1281 = vmul.f32 %v1279, %v157
    %v1282 = vadd.f32 %v1280, 1e-05
    %v1283 = vadd.f32 %v1281, 1e-05
    %v1284 = vrsqrt.pop %v1282
    %v1285 = vrsqrt.pop %v1283
    %v1286 = vmul.f32 %v1270, %v1284
    %v1287 = vmul.f32 %v1271, %v1285
    %v1288 = vlaneseq
    %v1289 = vshrl.u32 %v1288, 7
    %v1290 = vsub.s32 2, %v1289
    %v1291 = vrot.slane %v67, %v1290
    %v1292 = vmul.f32 %v1286, %v1291
    %v1293 = vmul.f32 %v1287, %v1291
    %v1294 = vlaneseq
    %v1295 = vshrl.u32 %v1294, 7
    %v1296 = vsub.s32 3, %v1295
    %v1297 = vrot.slane %v67, %v1296
    %v1298 = vadd.f32 %v1292, %v1297
    %v1299 = vadd.f32 %v1293, %v1297
    %1300 = vst.msk [vmem:[#allocation2] sm:$0xff] %vm150, %v1298
    %1301 = vst.msk [vmem:[#allocation2 + $0x8] sm:$0xff] %vm150, %v1299
    // Predicated region
    $region14: #{forward.1} parent=1 // pred_check
      _
    $region15: #{forward.1} parent=1 // pred_check_branch
      %1303 = sbr.rel (0) target = $region17
    $region16: #{forward.1} parent=1 // pred_region
      %s1305 = ssub.s32 256, 256
      %1306 = vsyncadd [#allocation3], %s1305
      %s1307 = sshll.u32 [#allocation2], 4
      %s1308 = int_to_ptr.vmem [resolvable:$true] %s1307
      %1313 = dma.vmem_to_hbm [thread:$0]  %s1308, 256, %s3, [#allocation3], 128, 128, 8
    $region17: #{forward.1} parent=1 // pred_fallthru
      _
    // Predicated region
    $region18: #{forward.1} parent=1 // pred_check
      _
    $region19: #{forward.1} parent=1 // pred_check_branch
      %1315 = sbr.rel (0) target = $region21
    $region20: #{forward.1} parent=1 // pred_region
      %1316 = dma.done [#allocation3], 256
    $region21: #{forward.1} parent=1 // pred_fallthru
      _
    %1317 = vsyncpa [#allocation3], 1

</llo_original>
